<compile_context>
chip_gen: v7x
topology: tpu7x:2x2x1
jax: 0.10.0
libtpu: 0.0.40
codegen_flags: <defaults>
</compile_context>

<pallas_src>
import math

import numpy as np
import jax
import jax.numpy as jnp
from jax.experimental import pallas as pl
from jax.experimental.pallas import tpu as pltpu

LOG_SIG_MAX = 2.0
LOG_SIG_MIN = -20.0
_TANH_EPS = 1e-6
_HALF_LOG_2PI = 0.5 * math.log(2.0 * math.pi)
_MAX_BATCH_TILE = 512          # 128 MiB VMEM on v5e/v6e; per-tile intermediates are a few MiB


def _round_up(x, m):
    return ((x + m - 1) // m) * m


def _choose_batch_tile(b):
    """Batch tile: >=2 grid steps for medium/large batches (both TCs on v7x), capped at 512."""
    if b <= 32:
        return _round_up(b, 8)
    return min(_MAX_BATCH_TILE, _round_up((b + 1) // 2, 16))


# ---------------------------------------------------------------------------
# Kernel
# ---------------------------------------------------------------------------
def _hyper_policy_kernel(meta_ref, base_ref, eps_ref,
                         we_ref, be_ref,
                         rb_ref, tz_ref, g1_ref, bg1_ref, gb1_ref, bgb1_ref,
                         gheadr_ref, ez_ref, coll_ref, bgheadt_ref, gbhead_ref, bgbhead_ref,
                         out_ref):
    f32 = jnp.float32
    bf16 = jnp.bfloat16

    meta = meta_ref[...]                      # [TB, M]  bf16
    base = base_ref[...]                      # [TB, D]  bf16
    eps = eps_ref[...]                        # [TB, A]  f32
    A = eps.shape[1]

    # ---- meta embedding (hyper trunk) ----
    z = jnp.maximum(
        jnp.dot(meta, we_ref[...], preferred_element_type=f32) + be_ref[...], 0.0)
    zb = z.astype(bf16)                       # [TB, Hz]

    # ---- fused dynamic first layer ----
    # hid = relu( (base (x) z) @ G1_2d + base @ bG1 + z @ Gb1 + bGb1 )
    base_rep = jnp.dot(base, rb_ref[...], preferred_element_type=f32)    # [TB, D*Hz]
    z_til = jnp.dot(zb, tz_ref[...], preferred_element_type=f32)         # [TB, D*Hz]
    outer1 = (base_rep * z_til).astype(bf16)  # f32 VPU multiply (v5e-safe), single narrowing cast
    hid = jnp.maximum(
        jnp.dot(outer1, g1_ref[...], preferred_element_type=f32)
        + jnp.dot(base, bg1_ref[...], preferred_element_type=f32)
        + jnp.dot(zb, gb1_ref[...], preferred_element_type=f32)
        + bgb1_ref[...], 0.0)                                             # [TB, Hb]
    hb = hid.astype(bf16)

    # ---- fused output heads (mu | log_std), contracted over h FIRST ----
    # head_dyn[b,j] = sum_k z[b,k] * (sum_h hid[b,h] * Ghead_r[h, k*2A+j])
    t_kh = jnp.dot(hb, gheadr_ref[...], preferred_element_type=f32)       # [TB, Hz*2A]
    z_exp = jnp.dot(zb, ez_ref[...], preferred_element_type=f32)          # [TB, Hz*2A]
    prod = (t_kh * z_exp).astype(bf16)
    head = (jnp.dot(prod, coll_ref[...], preferred_element_type=f32)
            + jnp.dot(hb, bgheadt_ref[...], preferred_element_type=f32)
            + jnp.dot(zb, gbhead_ref[...], preferred_element_type=f32)
            + bgbhead_ref[...])                                           # [TB, 2A]
    mu = head[:, :A]
    log_std = jnp.clip(head[:, A:], LOG_SIG_MIN, LOG_SIG_MAX)

    # ---- TanhNormal tail (f32) ----
    std = jnp.exp(log_std)
    pre_tanh = mu + std * eps                 # eps = 0 -> deterministic action = tanh(mu)
    action = jnp.tanh(pre_tanh)
    # (pre_tanh - mu)/std == eps by construction
    normal_lp = -0.5 * eps * eps - log_std - _HALF_LOG_2PI
    lp = normal_lp - jnp.log(1.0 - action * action + _TANH_EPS)
    log_prob = jnp.sum(lp, axis=1, keepdims=True)                         # [TB, 1]

    # single lane-dense output slab: [action | mu | log_std | std | pre_tanh | log_prob | 0-pad]
    pieces = [action, mu, log_std, std, pre_tanh, log_prob]
    pad_w = out_ref.shape[1] - (5 * A + 1)
    if pad_w:
        pieces.append(jnp.zeros((action.shape[0], pad_w), f32))
    out_ref[...] = jnp.concatenate(pieces, axis=1)


# ---------------------------------------------------------------------------
# Wrapper
# ---------------------------------------------------------------------------
@jax.jit
def hyper_policy_forward(meta_v, base_v, eps, kparams):
    """Runs the whole hyper-policy forward inside one Pallas kernel call."""
    B = meta_v.shape[0]
    A = eps.shape[1]
    out_w = 5 * A + 1
    out_lanes = _round_up(out_w, 128)         # lane-dense, unmasked output store + writeback

    tb = _choose_batch_tile(B)
    bp = _round_up(B, tb)
    if bp != B:                               # pad batch to a multiple of the tile
        pad = ((0, bp - B), (0, 0))
        meta_v = jnp.pad(meta_v, pad)
        base_v = jnp.pad(base_v, pad)
        eps = jnp.pad(eps, pad)

    meta_bf = meta_v.astype(jnp.bfloat16)
    base_bf = base_v.astype(jnp.bfloat16)
    eps = eps.astype(jnp.float32)

    batch_spec = lambda w: pl.BlockSpec((tb, w), lambda i: (i, 0))
    # parameters: full arrays, constant block index -> stay resident across grid steps
    param_specs = [pl.BlockSpec(p.shape, lambda i: (0, 0)) for p in kparams]

    out = pl.pallas_call(
        _hyper_policy_kernel,
        out_shape=jax.ShapeDtypeStruct((bp, out_lanes), jnp.float32),
        grid=(bp // tb,),
        in_specs=[batch_spec(meta_bf.shape[1]),
                  batch_spec(base_bf.shape[1]),
                  batch_spec(A)] + param_specs,
        out_specs=pl.BlockSpec((tb, out_lanes), lambda i: (i, 0)),
        compiler_params=pltpu.CompilerParams(
            dimension_semantics=("parallel",)),
    )(meta_bf, base_bf, eps, *kparams)

    out = out[:B, :out_w]
    action = out[:, 0 * A:1 * A]
    mu = out[:, 1 * A:2 * A]
    log_std = out[:, 2 * A:3 * A]
    std = out[:, 3 * A:4 * A]
    pre_tanh = out[:, 4 * A:5 * A]
    log_prob = out[:, 5 * A:5 * A + 1]
    return action, mu, log_std, log_prob, std, pre_tanh


# ---------------------------------------------------------------------------
# Parameters
# ---------------------------------------------------------------------------
def init_params(key, meta_dim, base_dim, hz, hb, action_dim):
    ks = jax.random.split(key, 10)
    n = lambda k, shape, fan: jax.random.normal(k, shape, jnp.float32) / np.sqrt(fan)
    return {
        "We": n(ks[0], (meta_dim, hz), meta_dim),
        "be": jnp.zeros((1, hz), jnp.float32),
        "G1": 0.3 * n(ks[1], (base_dim, hz, hb), hz),
        "bG1": 0.1 * n(ks[2], (base_dim, hb), base_dim),
        "Gb1": 0.3 * n(ks[3], (hz, hb), hz),
        "bGb1": jnp.zeros((1, hb), jnp.float32),
        "Gmu": 0.3 * n(ks[4], (action_dim, hz, hb), hz),
        "bGmu": 0.1 * n(ks[5], (action_dim, hb), hb),
        "Gbmu": 0.3 * n(ks[6], (hz, action_dim), hz),
        "bGbmu": jnp.zeros((1, action_dim), jnp.float32),
        "Gls": 0.3 * n(ks[7], (action_dim, hz, hb), hz),
        "bGls": jnp.zeros((action_dim, hb), jnp.float32),
        "Gbls": 0.3 * n(ks[8], (hz, action_dim), hz),
        "bGbls": jnp.zeros((1, action_dim), jnp.float32),
    }


def prepare_kernel_params(p):
    """All layout plumbing (reshape/transpose/pack/bf16 cast) done once, outside the kernel."""
    bf16, f32 = jnp.bfloat16, jnp.float32
    D, Hz, Hb = p["G1"].shape
    A = p["Gmu"].shape[0]
    A2 = 2 * A

    # 0/1 expansion / collapse matrices so the MXU performs the outer-product broadcasting.
    rb = np.kron(np.eye(D, dtype=np.float32), np.ones((1, Hz), np.float32))     # [D,  D*Hz]
    tz = np.tile(np.eye(Hz, dtype=np.float32), (1, D))                          # [Hz, D*Hz]
    ez = np.kron(np.eye(Hz, dtype=np.float32), np.ones((1, A2), np.float32))    # [Hz, Hz*2A]
    coll = np.tile(np.eye(A2, dtype=np.float32), (Hz, 1))                       # [Hz*2A, 2A]

    g1_2d = p["G1"].reshape(D * Hz, Hb)                                         # [D*Hz, Hb]

    # head generators repacked so the h-contraction comes FIRST:
    # ghead_r[h, k*2A + j] = Gmu[j,k,h] for j < A, Gls[j-A,k,h] otherwise
    ghead_r = jnp.concatenate([jnp.transpose(p["Gmu"], (2, 1, 0)),
                               jnp.transpose(p["Gls"], (2, 1, 0))],
                              axis=-1).reshape(Hb, Hz * A2)                     # [Hb, Hz*2A]

    bghead_t = jnp.concatenate([p["bGmu"].T, p["bGls"].T], axis=1)              # [Hb, 2A]
    gbhead = jnp.concatenate([p["Gbmu"], p["Gbls"]], axis=1)                    # [Hz, 2A]
    bgbhead = jnp.concatenate([p["bGbmu"], p["bGbls"]], axis=1)                 # [1,  2A]

    return (
        p["We"].astype(bf16), p["be"].astype(f32),
        jnp.asarray(rb, bf16), jnp.asarray(tz, bf16),
        g1_2d.astype(bf16), p["bG1"].astype(bf16),
        p["Gb1"].astype(bf16), p["bGb1"].astype(f32),
        ghead_r.astype(bf16), jnp.asarray(ez, bf16), jnp.asarray(coll, bf16),
        bghead_t.astype(bf16), gbhead.astype(bf16), bgbhead.astype(f32),
    )


# ---------------------------------------------------------------------------
# Module wrapper (mirrors Hyper_Policy.forward)
# ---------------------------------------------------------------------------
class HyperPolicyPallas:
    def __init__(self, obs_dim, latent_dim, action_dim, use_reverse=False,
                 hidden_dim=32, key=jax.random.PRNGKey(42)):
        self.reverse = use_reverse
        meta_dim = obs_dim if use_reverse else latent_dim
        base_dim = latent_dim if use_reverse else obs_dim
        self.action_dim = action_dim
        self.params = init_params(key, meta_dim, base_dim, hidden_dim, hidden_dim, action_dim)
        self.kernel_params = prepare_kernel_params(self.params)

    def forward(self, obs, task, rng_key, reparameterize=False,
                deterministic=False, return_log_prob=False):
        meta_v, base_v = (obs, task) if self.reverse else (task, obs)
        B = obs.shape[0]
        if deterministic:
            eps = jnp.zeros((B, self.action_dim), jnp.float32)
        else:
            # TODO(synk): torch.distributions TanhNormal sampling replaced by explicit N(0,1)
            # reparameterization noise fed to the kernel.
            eps = jax.random.normal(rng_key, (B, self.action_dim), jnp.float32)
        action, mu, log_std, log_prob, std, pre_tanh = hyper_policy_forward(
            meta_v, base_v, eps, self.kernel_params)
        if deterministic or not return_log_prob:
            log_prob = None
            pre_tanh = None
        return (action, mu, log_std, log_prob, None, std, None, pre_tanh)


# ---------------------------------------------------------------------------
# Pure-JAX references for correctness checks
# ---------------------------------------------------------------------------
def _reference_forward(meta, base, eps, p):
    """Full-f32 module spec (original einsum formulation, HIGHEST precision)."""
    hi = jax.lax.Precision.HIGHEST
    z = jax.nn.relu(jnp.dot(meta, p["We"], precision=hi) + p["be"])
    w1 = jnp.einsum("bk,iko->bio", z, p["G1"], precision=hi) + p["bG1"][None]
    b1 = jnp.dot(z, p["Gb1"], precision=hi) + p["bGb1"]
    hid = jax.nn.relu(jnp.einsum("bi,bio->bo", base, w1, precision=hi) + b1)
    wmu = jnp.einsum("bk,ako->bao", z, p["Gmu"], precision=hi) + p["bGmu"][None]
    mu = (jnp.einsum("bh,bah->ba", hid, wmu, precision=hi)
          + jnp.dot(z, p["Gbmu"], precision=hi) + p["bGbmu"])
    wls = jnp.einsum("bk,ako->bao", z, p["Gls"], precision=hi) + p["bGls"][None]
    ls = (jnp.einsum("bh,bah->ba", hid, wls, precision=hi)
          + jnp.dot(z, p["Gbls"], precision=hi) + p["bGbls"])
    log_std = jnp.clip(ls, LOG_SIG_MIN, LOG_SIG_MAX)
    std = jnp.exp(log_std)
    pre_tanh = mu + std * eps
    action = jnp.tanh(pre_tanh)
    nlp = -0.5 * eps * eps - log_std - _HALF_LOG_2PI
    lp = nlp - jnp.log(1.0 - action * action + _TANH_EPS)
    return action, mu, log_std, lp.sum(axis=1, keepdims=True), std, pre_tanh


def _kernel_numerics_reference(meta, base, eps, kp):
    """Emulates the kernel's mixed-precision algorithm exactly (same bf16 rounding points)."""
    f32 = jnp.float32
    q = lambda x: x.astype(jnp.bfloat16).astype(f32)
    hi = jax.lax.Precision.HIGHEST
    dot = lambda a, b: jnp.dot(a, b, precision=hi)
    (we, be, rb, tz, g1, bg1, gb1, bgb1,
     gheadr, ez, coll, bgheadt, gbhead, bgbhead) = [jnp.asarray(x, f32) for x in kp]
    A = eps.shape[1]

    meta_q, base_q = q(meta), q(base)
    z = jax.nn.relu(dot(meta_q, we) + be)
    zq = q(z)
    outer1 = q(dot(base_q, rb) * dot(zq, tz))
    hid = jax.nn.relu(dot(outer1, g1) + dot(base_q, bg1) + dot(zq, gb1) + bgb1)
    hq = q(hid)
    prod = q(dot(hq, gheadr) * dot(zq, ez))
    head = dot(prod, coll) + dot(hq, bgheadt) + dot(zq, gbhead) + bgbhead
    mu = head[:, :A]
    log_std = jnp.clip(head[:, A:], LOG_SIG_MIN, LOG_SIG_MAX)
    std = jnp.exp(log_std)
    pre_tanh = mu + std * eps
    action = jnp.tanh(pre_tanh)
    nlp = -0.5 * eps * eps - log_std - _HALF_LOG_2PI
    lp = nlp - jnp.log(1.0 - action * action + _TANH_EPS)
    return action, mu, log_std, lp.sum(axis=1, keepdims=True), std, pre_tanh


# (name, atol, rtol) vs the numerics-emulating reference (tight; log_prob has the
# log(1 - tanh^2 + 1e-6) amplification of transcendental-implementation differences).
_EMU_TOLS = (
    ("action", 5e-3, 5e-3),
    ("mu", 5e-3, 5e-3),
    ("log_std", 5e-3, 5e-3),
    ("log_prob", 5e-1, 1e-1),
    ("std", 5e-3, 5e-3),
    ("pre_tanh", 5e-3, 5e-3),
)


def _check(got, ref, tols):
    for (name, atol, rtol), g, r in zip(tols, got, ref):
        g = np.asarray(g)
        r = np.asarray(r)
        assert np.all(np.isfinite(g)), name
        assert np.allclose(g, r, atol=atol, rtol=rtol), (name, float(np.abs(g - r).max()))


def _check_spec(got, ref):
    """Independent check vs the exact-f32 module spec: loose (bf16-quantization-sized) slack,
    but tight enough to catch any weight-packing / layout bug (those give O(1) errors)."""
    for idx, name, atol in ((0, "action", 1e-1), (1, "mu", 3e-1), (2, "log_std", 3e-1)):
        g = np.asarray(got[idx])
        r = np.asarray(ref[idx])
        assert np.allclose(g, r, atol=atol, rtol=2e-1), (name, float(np.abs(g - r).max()))


# ---------------------------------------------------------------------------
if __name__ == "__main__":
    B, OBS, LATENT, ACT, HID = 8, 16, 8, 4, 32

    root = jax.random.PRNGKey(0)
    k_obs, k_task, k_noise, k_param, k_big = jax.random.split(root, 5)
    obs = jax.random.normal(k_obs, (B, OBS), jnp.float32)
    task = jax.random.normal(k_task, (B, LATENT), jnp.float32)

    policy = HyperPolicyPallas(OBS, LATENT, ACT, use_reverse=False,
                               hidden_dim=HID, key=k_param)

    # stochastic path with log-prob
    outs = policy.forward(obs, task, k_noise,
                          reparameterize=True, deterministic=False, return_log_prob=True)
    action, mu, log_std, log_prob, _, std, _, pre_tanh = outs
    jax.block_until_ready(action)

    eps = jax.random.normal(k_noise, (B, ACT), jnp.float32)
    got = (action, mu, log_std, log_prob, std, pre_tanh)
    _check(got, _kernel_numerics_reference(task, obs, eps, policy.kernel_params), _EMU_TOLS)
    _check_spec(got, _reference_forward(task, obs, eps, policy.params))

    # deterministic path (action = tanh(mu), no log_prob / pre_tanh), as in the torch module
    det = policy.forward(obs, task, k_noise, deterministic=True)
    jax.block_until_ready(det[0])
    assert det[3] is None and det[7] is None
    np.testing.assert_allclose(np.asarray(det[0]), np.tanh(np.asarray(det[1])),
                               atol=1e-5, rtol=1e-5)

    # larger, non-tile-multiple batch exercises the multi-step parallel grid + padding path
    B2 = 300
    obs2 = jax.random.normal(k_big, (B2, OBS), jnp.float32)
    task2 = jax.random.normal(jax.random.fold_in(k_big, 1), (B2, LATENT), jnp.float32)
    k_noise2 = jax.random.fold_in(k_big, 2)
    outs2 = policy.forward(obs2, task2, k_noise2,
                           reparameterize=True, deterministic=False, return_log_prob=True)
    jax.block_until_ready(outs2[0])
    eps2 = jax.random.normal(k_noise2, (B2, ACT), jnp.float32)
    got2 = (outs2[0], outs2[1], outs2[2], outs2[3], outs2[5], outs2[7])
    _check(got2, _kernel_numerics_reference(task2, obs2, eps2, policy.kernel_params), _EMU_TOLS)
    _check_spec(got2, _reference_forward(task2, obs2, eps2, policy.params))

    print("KERNEL_OK")
</pallas_src>

<mosaic_0001>
module attributes {stable_mosaic.version = 11 : i64} {
  func.func @_hyper_policy_kernel(%arg0: i32, %arg1: memref<8x8xbf16, #tpu.memory_space<vmem>>, %arg2: memref<8x16xbf16, #tpu.memory_space<vmem>>, %arg3: memref<8x4xf32, #tpu.memory_space<vmem>>, %arg4: memref<8x32xbf16, #tpu.memory_space<vmem>>, %arg5: memref<1x32xf32, #tpu.memory_space<vmem>>, %arg6: memref<16x512xbf16, #tpu.memory_space<vmem>>, %arg7: memref<32x512xbf16, #tpu.memory_space<vmem>>, %arg8: memref<512x32xbf16, #tpu.memory_space<vmem>>, %arg9: memref<16x32xbf16, #tpu.memory_space<vmem>>, %arg10: memref<32x32xbf16, #tpu.memory_space<vmem>>, %arg11: memref<1x32xf32, #tpu.memory_space<vmem>>, %arg12: memref<32x256xbf16, #tpu.memory_space<vmem>>, %arg13: memref<32x256xbf16, #tpu.memory_space<vmem>>, %arg14: memref<256x8xbf16, #tpu.memory_space<vmem>>, %arg15: memref<32x8xbf16, #tpu.memory_space<vmem>>, %arg16: memref<32x8xbf16, #tpu.memory_space<vmem>>, %arg17: memref<1x8xf32, #tpu.memory_space<vmem>>, %arg18: memref<8x128xf32, #tpu.memory_space<vmem>>) attributes {dimension_semantics = [#tpu.dimension_semantics<parallel>], iteration_bounds = array<i64: 1>, scalar_prefetch = 0 : i64, scratch_operands = 0 : i64, tpu.core_type = #tpu.core_type<tc>, window_params = [{transform_indices = @transform_0, window_bounds = array<i64: 8, 8>}, {transform_indices = @transform_1, window_bounds = array<i64: 8, 16>}, {transform_indices = @transform_2, window_bounds = array<i64: 8, 4>}, {pipeline_mode = #tpu.pipeline_mode<synchronous>, transform_indices = @transform_3, window_bounds = array<i64: 8, 32>}, {pipeline_mode = #tpu.pipeline_mode<synchronous>, transform_indices = @transform_4, window_bounds = array<i64: 1, 32>}, {pipeline_mode = #tpu.pipeline_mode<synchronous>, transform_indices = @transform_5, window_bounds = array<i64: 16, 512>}, {pipeline_mode = #tpu.pipeline_mode<synchronous>, transform_indices = @transform_6, window_bounds = array<i64: 32, 512>}, {pipeline_mode = #tpu.pipeline_mode<synchronous>, transform_indices = @transform_7, window_bounds = array<i64: 512, 32>}, {pipeline_mode = #tpu.pipeline_mode<synchronous>, transform_indices = @transform_8, window_bounds = array<i64: 16, 32>}, {pipeline_mode = #tpu.pipeline_mode<synchronous>, transform_indices = @transform_9, window_bounds = array<i64: 32, 32>}, {pipeline_mode = #tpu.pipeline_mode<synchronous>, transform_indices = @transform_10, window_bounds = array<i64: 1, 32>}, {pipeline_mode = #tpu.pipeline_mode<synchronous>, transform_indices = @transform_11, window_bounds = array<i64: 32, 256>}, {pipeline_mode = #tpu.pipeline_mode<synchronous>, transform_indices = @transform_12, window_bounds = array<i64: 32, 256>}, {pipeline_mode = #tpu.pipeline_mode<synchronous>, transform_indices = @transform_13, window_bounds = array<i64: 256, 8>}, {pipeline_mode = #tpu.pipeline_mode<synchronous>, transform_indices = @transform_14, window_bounds = array<i64: 32, 8>}, {pipeline_mode = #tpu.pipeline_mode<synchronous>, transform_indices = @transform_15, window_bounds = array<i64: 32, 8>}, {pipeline_mode = #tpu.pipeline_mode<synchronous>, transform_indices = @transform_16, window_bounds = array<i64: 1, 8>}, {transform_indices = @transform_17, window_bounds = array<i64: 8, 128>}]} {
    %c0 = arith.constant 0 : index
    %c0_0 = arith.constant 0 : index
    %0 = vector.load %arg1[%c0, %c0_0] : memref<8x8xbf16, #tpu.memory_space<vmem>>, vector<8x8xbf16>
    %c0_1 = arith.constant 0 : index
    %c0_2 = arith.constant 0 : index
    %1 = vector.load %arg2[%c0_1, %c0_2] : memref<8x16xbf16, #tpu.memory_space<vmem>>, vector<8x16xbf16>
    %c0_3 = arith.constant 0 : index
    %c0_4 = arith.constant 0 : index
    %2 = vector.load %arg3[%c0_3, %c0_4] : memref<8x4xf32, #tpu.memory_space<vmem>>, vector<8x4xf32>
    %c0_5 = arith.constant 0 : index
    %c0_6 = arith.constant 0 : index
    %3 = vector.load %arg4[%c0_5, %c0_6] : memref<8x32xbf16, #tpu.memory_space<vmem>>, vector<8x32xbf16>
    %cst = arith.constant dense<0.000000e+00> : vector<8x32xf32>
    %4 = tpu.matmul %0, %3, %cst {dimension_numbers = #tpu.dot_dimension_numbers<[1], [0], [0], [1], [0, 0, 1, 1], [], []>} : vector<8x8xbf16>, vector<8x32xbf16>, vector<8x32xf32> -> vector<8x32xf32>
    %c0_7 = arith.constant 0 : index
    %c0_8 = arith.constant 0 : index
    %5 = vector.load %arg5[%c0_7, %c0_8] : memref<1x32xf32, #tpu.memory_space<vmem>>, vector<1x32xf32>
    %6 = vector.broadcast %5 : vector<1x32xf32> to vector<8x32xf32>
    %7 = arith.addf %4, %6 : vector<8x32xf32>
    %cst_9 = arith.constant 0.000000e+00 : f32
    %8 = vector.broadcast %cst_9 : f32 to vector<8x32xf32>
    %9 = arith.maximumf %7, %8 : vector<8x32xf32>
    %10 = arith.truncf %9 : vector<8x32xf32> to vector<8x32xbf16>
    %c0_10 = arith.constant 0 : index
    %c0_11 = arith.constant 0 : index
    %11 = vector.load %arg6[%c0_10, %c0_11] : memref<16x512xbf16, #tpu.memory_space<vmem>>, vector<16x512xbf16>
    %cst_12 = arith.constant dense<0.000000e+00> : vector<8x512xf32>
    %12 = tpu.matmul %1, %11, %cst_12 {dimension_numbers = #tpu.dot_dimension_numbers<[1], [0], [0], [1], [0, 0, 1, 1], [], []>} : vector<8x16xbf16>, vector<16x512xbf16>, vector<8x512xf32> -> vector<8x512xf32>
    %c0_13 = arith.constant 0 : index
    %c0_14 = arith.constant 0 : index
    %13 = vector.load %arg7[%c0_13, %c0_14] : memref<32x512xbf16, #tpu.memory_space<vmem>>, vector<32x512xbf16>
    %cst_15 = arith.constant dense<0.000000e+00> : vector<8x512xf32>
    %14 = tpu.matmul %10, %13, %cst_15 {dimension_numbers = #tpu.dot_dimension_numbers<[1], [0], [0], [1], [0, 0, 1, 1], [], []>} : vector<8x32xbf16>, vector<32x512xbf16>, vector<8x512xf32> -> vector<8x512xf32>
    %15 = arith.mulf %12, %14 : vector<8x512xf32>
    %16 = arith.truncf %15 : vector<8x512xf32> to vector<8x512xbf16>
    %c0_16 = arith.constant 0 : index
    %c0_17 = arith.constant 0 : index
    %17 = vector.load %arg8[%c0_16, %c0_17] : memref<512x32xbf16, #tpu.memory_space<vmem>>, vector<512x32xbf16>
    %cst_18 = arith.constant dense<0.000000e+00> : vector<8x32xf32>
    %18 = tpu.matmul %16, %17, %cst_18 {dimension_numbers = #tpu.dot_dimension_numbers<[1], [0], [0], [1], [0, 0, 1, 1], [], []>} : vector<8x512xbf16>, vector<512x32xbf16>, vector<8x32xf32> -> vector<8x32xf32>
    %c0_19 = arith.constant 0 : index
    %c0_20 = arith.constant 0 : index
    %19 = vector.load %arg9[%c0_19, %c0_20] : memref<16x32xbf16, #tpu.memory_space<vmem>>, vector<16x32xbf16>
    %cst_21 = arith.constant dense<0.000000e+00> : vector<8x32xf32>
    %20 = tpu.matmul %1, %19, %cst_21 {dimension_numbers = #tpu.dot_dimension_numbers<[1], [0], [0], [1], [0, 0, 1, 1], [], []>} : vector<8x16xbf16>, vector<16x32xbf16>, vector<8x32xf32> -> vector<8x32xf32>
    %21 = arith.addf %18, %20 : vector<8x32xf32>
    %c0_22 = arith.constant 0 : index
    %c0_23 = arith.constant 0 : index
    %22 = vector.load %arg10[%c0_22, %c0_23] : memref<32x32xbf16, #tpu.memory_space<vmem>>, vector<32x32xbf16>
    %cst_24 = arith.constant dense<0.000000e+00> : vector<8x32xf32>
    %23 = tpu.matmul %10, %22, %cst_24 {dimension_numbers = #tpu.dot_dimension_numbers<[1], [0], [0], [1], [0, 0, 1, 1], [], []>} : vector<8x32xbf16>, vector<32x32xbf16>, vector<8x32xf32> -> vector<8x32xf32>
    %24 = arith.addf %21, %23 : vector<8x32xf32>
    %c0_25 = arith.constant 0 : index
    %c0_26 = arith.constant 0 : index
    %25 = vector.load %arg11[%c0_25, %c0_26] : memref<1x32xf32, #tpu.memory_space<vmem>>, vector<1x32xf32>
    %26 = vector.broadcast %25 : vector<1x32xf32> to vector<8x32xf32>
    %27 = arith.addf %24, %26 : vector<8x32xf32>
    %cst_27 = arith.constant 0.000000e+00 : f32
    %28 = vector.broadcast %cst_27 : f32 to vector<8x32xf32>
    %29 = arith.maximumf %27, %28 : vector<8x32xf32>
    %30 = arith.truncf %29 : vector<8x32xf32> to vector<8x32xbf16>
    %c0_28 = arith.constant 0 : index
    %c0_29 = arith.constant 0 : index
    %31 = vector.load %arg12[%c0_28, %c0_29] : memref<32x256xbf16, #tpu.memory_space<vmem>>, vector<32x256xbf16>
    %cst_30 = arith.constant dense<0.000000e+00> : vector<8x256xf32>
    %32 = tpu.matmul %30, %31, %cst_30 {dimension_numbers = #tpu.dot_dimension_numbers<[1], [0], [0], [1], [0, 0, 1, 1], [], []>} : vector<8x32xbf16>, vector<32x256xbf16>, vector<8x256xf32> -> vector<8x256xf32>
    %c0_31 = arith.constant 0 : index
    %c0_32 = arith.constant 0 : index
    %33 = vector.load %arg13[%c0_31, %c0_32] : memref<32x256xbf16, #tpu.memory_space<vmem>>, vector<32x256xbf16>
    %cst_33 = arith.constant dense<0.000000e+00> : vector<8x256xf32>
    %34 = tpu.matmul %10, %33, %cst_33 {dimension_numbers = #tpu.dot_dimension_numbers<[1], [0], [0], [1], [0, 0, 1, 1], [], []>} : vector<8x32xbf16>, vector<32x256xbf16>, vector<8x256xf32> -> vector<8x256xf32>
    %35 = arith.mulf %32, %34 : vector<8x256xf32>
    %36 = arith.truncf %35 : vector<8x256xf32> to vector<8x256xbf16>
    %c0_34 = arith.constant 0 : index
    %c0_35 = arith.constant 0 : index
    %37 = vector.load %arg14[%c0_34, %c0_35] : memref<256x8xbf16, #tpu.memory_space<vmem>>, vector<256x8xbf16>
    %cst_36 = arith.constant dense<0.000000e+00> : vector<8x8xf32>
    %38 = tpu.matmul %36, %37, %cst_36 {dimension_numbers = #tpu.dot_dimension_numbers<[1], [0], [0], [1], [0, 0, 1, 1], [], []>} : vector<8x256xbf16>, vector<256x8xbf16>, vector<8x8xf32> -> vector<8x8xf32>
    %c0_37 = arith.constant 0 : index
    %c0_38 = arith.constant 0 : index
    %39 = vector.load %arg15[%c0_37, %c0_38] : memref<32x8xbf16, #tpu.memory_space<vmem>>, vector<32x8xbf16>
    %cst_39 = arith.constant dense<0.000000e+00> : vector<8x8xf32>
    %40 = tpu.matmul %30, %39, %cst_39 {dimension_numbers = #tpu.dot_dimension_numbers<[1], [0], [0], [1], [0, 0, 1, 1], [], []>} : vector<8x32xbf16>, vector<32x8xbf16>, vector<8x8xf32> -> vector<8x8xf32>
    %41 = arith.addf %38, %40 : vector<8x8xf32>
    %c0_40 = arith.constant 0 : index
    %c0_41 = arith.constant 0 : index
    %42 = vector.load %arg16[%c0_40, %c0_41] : memref<32x8xbf16, #tpu.memory_space<vmem>>, vector<32x8xbf16>
    %cst_42 = arith.constant dense<0.000000e+00> : vector<8x8xf32>
    %43 = tpu.matmul %10, %42, %cst_42 {dimension_numbers = #tpu.dot_dimension_numbers<[1], [0], [0], [1], [0, 0, 1, 1], [], []>} : vector<8x32xbf16>, vector<32x8xbf16>, vector<8x8xf32> -> vector<8x8xf32>
    %44 = arith.addf %41, %43 : vector<8x8xf32>
    %c0_43 = arith.constant 0 : index
    %c0_44 = arith.constant 0 : index
    %45 = vector.load %arg17[%c0_43, %c0_44] : memref<1x8xf32, #tpu.memory_space<vmem>>, vector<1x8xf32>
    %46 = vector.broadcast %45 : vector<1x8xf32> to vector<8x8xf32>
    %47 = arith.addf %44, %46 : vector<8x8xf32>
    %48 = vector.extract_strided_slice %47 {offsets = [0, 0], sizes = [8, 4], strides = [1, 1]} : vector<8x8xf32> to vector<8x4xf32>
    %49 = vector.extract_strided_slice %47 {offsets = [0, 4], sizes = [8, 4], strides = [1, 1]} : vector<8x8xf32> to vector<8x4xf32>
    %cst_45 = arith.constant -2.000000e+01 : f32
    %cst_46 = arith.constant 2.000000e+00 : f32
    %50 = vector.broadcast %cst_45 : f32 to vector<8x4xf32>
    %51 = arith.maximumf %50, %49 : vector<8x4xf32>
    %52 = vector.broadcast %cst_46 : f32 to vector<8x4xf32>
    %53 = arith.minimumf %52, %51 : vector<8x4xf32>
    %54 = math.exp %53 : vector<8x4xf32>
    %55 = arith.mulf %54, %2 : vector<8x4xf32>
    %56 = arith.addf %48, %55 : vector<8x4xf32>
    %57 = math.tanh %56 : vector<8x4xf32>
    %cst_47 = arith.constant -5.000000e-01 : f32
    %58 = vector.broadcast %cst_47 : f32 to vector<8x4xf32>
    %59 = arith.mulf %58, %2 : vector<8x4xf32>
    %60 = arith.mulf %59, %2 : vector<8x4xf32>
    %61 = arith.subf %60, %53 : vector<8x4xf32>
    %cst_48 = arith.constant 0.918938517 : f32
    %62 = vector.broadcast %cst_48 : f32 to vector<8x4xf32>
    %63 = arith.subf %61, %62 : vector<8x4xf32>
    %64 = arith.mulf %57, %57 : vector<8x4xf32>
    %cst_49 = arith.constant 1.000000e+00 : f32
    %65 = vector.broadcast %cst_49 : f32 to vector<8x4xf32>
    %66 = arith.subf %65, %64 : vector<8x4xf32>
    %cst_50 = arith.constant 9.99999997E-7 : f32
    %67 = vector.broadcast %cst_50 : f32 to vector<8x4xf32>
    %68 = arith.addf %66, %67 : vector<8x4xf32>
    %69 = math.log %68 : vector<8x4xf32>
    %70 = arith.subf %63, %69 : vector<8x4xf32>
    %cst_51 = arith.constant dense<0.000000e+00> : vector<8xf32>
    %71 = vector.multi_reduction <add>, %70, %cst_51 [1] : vector<8x4xf32> to vector<8xf32>
    %72 = vector.shape_cast %71 : vector<8xf32> to vector<8x1xf32>
    %cst_52 = arith.constant 0.000000e+00 : f32
    %73 = vector.broadcast %cst_52 : f32 to vector<8x107xf32>
    %74 = tpu.concatenate %57, %48, %53, %54, %56, %72, %73 in 1 : vector<8x4xf32>, vector<8x4xf32>, vector<8x4xf32>, vector<8x4xf32>, vector<8x4xf32>, vector<8x1xf32>, vector<8x107xf32> -> vector<8x128xf32>
    %c0_53 = arith.constant 0 : index
    %c0_54 = arith.constant 0 : index
    %75 = vector.load %arg18[%c0_53, %c0_54] : memref<8x128xf32, #tpu.memory_space<vmem>>, vector<8x128xf32>
    tpu.vector_store %arg18[%c0_53, %c0_54], %74 {strides = array<i32>} : memref<8x128xf32, #tpu.memory_space<vmem>>, vector<8x128xf32>,
    return
  }
  func.func @transform_0(%arg0: i32) -> (i32, i32) {
    %c0_i32 = arith.constant 0 : i32
    %c0_i32_0 = arith.constant 0 : i32
    return %arg0, %c0_i32 : i32, i32
  }
  func.func @transform_1(%arg0: i32) -> (i32, i32) {
    %c0_i32 = arith.constant 0 : i32
    %c0_i32_0 = arith.constant 0 : i32
    return %arg0, %c0_i32 : i32, i32
  }
  func.func @transform_2(%arg0: i32) -> (i32, i32) {
    %c0_i32 = arith.constant 0 : i32
    %c0_i32_0 = arith.constant 0 : i32
    return %arg0, %c0_i32 : i32, i32
  }
  func.func @transform_3(%arg0: i32) -> (i32, i32) {
    %c0_i32 = arith.constant 0 : i32
    %c0_i32_0 = arith.constant 0 : i32
    %c0_i32_1 = arith.constant 0 : i32
    return %c0_i32, %c0_i32_0 : i32, i32
  }
  func.func @transform_4(%arg0: i32) -> (i32, i32) {
    %c0_i32 = arith.constant 0 : i32
    %c0_i32_0 = arith.constant 0 : i32
    %c0_i32_1 = arith.constant 0 : i32
    return %c0_i32, %c0_i32_0 : i32, i32
  }
  func.func @transform_5(%arg0: i32) -> (i32, i32) {
    %c0_i32 = arith.constant 0 : i32
    %c0_i32_0 = arith.constant 0 : i32
    %c0_i32_1 = arith.constant 0 : i32
    return %c0_i32, %c0_i32_0 : i32, i32
  }
  func.func @transform_6(%arg0: i32) -> (i32, i32) {
    %c0_i32 = arith.constant 0 : i32
    %c0_i32_0 = arith.constant 0 : i32
    %c0_i32_1 = arith.constant 0 : i32
    return %c0_i32, %c0_i32_0 : i32, i32
  }
  func.func @transform_7(%arg0: i32) -> (i32, i32) {
    %c0_i32 = arith.constant 0 : i32
    %c0_i32_0 = arith.constant 0 : i32
    %c0_i32_1 = arith.constant 0 : i32
    return %c0_i32, %c0_i32_0 : i32, i32
  }
  func.func @transform_8(%arg0: i32) -> (i32, i32) {
    %c0_i32 = arith.constant 0 : i32
    %c0_i32_0 = arith.constant 0 : i32
    %c0_i32_1 = arith.constant 0 : i32
    return %c0_i32, %c0_i32_0 : i32, i32
  }
  func.func @transform_9(%arg0: i32) -> (i32, i32) {
    %c0_i32 = arith.constant 0 : i32
    %c0_i32_0 = arith.constant 0 : i32
    %c0_i32_1 = arith.constant 0 : i32
    return %c0_i32, %c0_i32_0 : i32, i32
  }
  func.func @transform_10(%arg0: i32) -> (i32, i32) {
    %c0_i32 = arith.constant 0 : i32
    %c0_i32_0 = arith.constant 0 : i32
    %c0_i32_1 = arith.constant 0 : i32
    return %c0_i32, %c0_i32_0 : i32, i32
  }
  func.func @transform_11(%arg0: i32) -> (i32, i32) {
    %c0_i32 = arith.constant 0 : i32
    %c0_i32_0 = arith.constant 0 : i32
    %c0_i32_1 = arith.constant 0 : i32
    return %c0_i32, %c0_i32_0 : i32, i32
  }
  func.func @transform_12(%arg0: i32) -> (i32, i32) {
    %c0_i32 = arith.constant 0 : i32
    %c0_i32_0 = arith.constant 0 : i32
    %c0_i32_1 = arith.constant 0 : i32
    return %c0_i32, %c0_i32_0 : i32, i32
  }
  func.func @transform_13(%arg0: i32) -> (i32, i32) {
    %c0_i32 = arith.constant 0 : i32
    %c0_i32_0 = arith.constant 0 : i32
    %c0_i32_1 = arith.constant 0 : i32
    return %c0_i32, %c0_i32_0 : i32, i32
  }
  func.func @transform_14(%arg0: i32) -> (i32, i32) {
    %c0_i32 = arith.constant 0 : i32
    %c0_i32_0 = arith.constant 0 : i32
    %c0_i32_1 = arith.constant 0 : i32
    return %c0_i32, %c0_i32_0 : i32, i32
  }
  func.func @transform_15(%arg0: i32) -> (i32, i32) {
    %c0_i32 = arith.constant 0 : i32
    %c0_i32_0 = arith.constant 0 : i32
    %c0_i32_1 = arith.constant 0 : i32
    return %c0_i32, %c0_i32_0 : i32, i32
  }
  func.func @transform_16(%arg0: i32) -> (i32, i32) {
    %c0_i32 = arith.constant 0 : i32
    %c0_i32_0 = arith.constant 0 : i32
    %c0_i32_1 = arith.constant 0 : i32
    return %c0_i32, %c0_i32_0 : i32, i32
  }
  func.func @transform_17(%arg0: i32) -> (i32, i32) {
    %c0_i32 = arith.constant 0 : i32
    %c0_i32_0 = arith.constant 0 : i32
    return %arg0, %c0_i32 : i32, i32
  }
}

</mosaic_0001>

<llo_original>
// kernel: hyper_policy_forward.1
$region0: #{hyper_policy_forward.1}
  #allocation0 [shape = 'u32[]', space=smem, size = 0x4, offset = 0x4, fixed_abs, tag = 'smem constant byte address 0x4 - core index']
  #allocation1 [shape = 'u32[144,128]{1,0:T(1,128)}', space=vmem, size = 0x12000, scoped, tag = 'internal scratch']
  %s0 = inlined_call_operand.vmem [shape: bf16[8,8], index: 0, kind: input, shape index: {}]
  %s1 = inlined_call_operand.vmem [shape: bf16[8,16], index: 1, kind: input, shape index: {}]
  %s2 = inlined_call_operand.vmem [shape: f32[8,4], index: 2, kind: input, shape index: {}]
  %s3 = inlined_call_operand.vmem [shape: bf16[8,32], index: 3, kind: input, shape index: {}]
  %s4 = inlined_call_operand.vmem [shape: f32[1,32], index: 4, kind: input, shape index: {}]
  %s5 = inlined_call_operand.vmem [shape: bf16[16,512], index: 5, kind: input, shape index: {}]
  %s6 = inlined_call_operand.vmem [shape: bf16[32,512], index: 6, kind: input, shape index: {}]
  %s7 = inlined_call_operand.vmem [shape: bf16[512,32], index: 7, kind: input, shape index: {}]
  %s8 = inlined_call_operand.vmem [shape: bf16[16,32], index: 8, kind: input, shape index: {}]
  %s9 = inlined_call_operand.vmem [shape: bf16[32,32], index: 9, kind: input, shape index: {}]
  %s10 = inlined_call_operand.vmem [shape: f32[1,32], index: 10, kind: input, shape index: {}]
  %s11 = inlined_call_operand.vmem [shape: bf16[32,256], index: 11, kind: input, shape index: {}]
  %s12 = inlined_call_operand.vmem [shape: bf16[32,256], index: 12, kind: input, shape index: {}]
  %s13 = inlined_call_operand.vmem [shape: bf16[256,8], index: 13, kind: input, shape index: {}]
  %s14 = inlined_call_operand.vmem [shape: bf16[32,8], index: 14, kind: input, shape index: {}]
  %s15 = inlined_call_operand.vmem [shape: bf16[32,8], index: 15, kind: input, shape index: {}]
  %s16 = inlined_call_operand.vmem [shape: f32[1,8], index: 16, kind: input, shape index: {}]
  %s17 = inlined_call_operand.vmem [shape: f32[8,128], index: 17, kind: output, shape index: {}]
  %s18 = sld [smem:[#allocation0]]
  $region78: #{hyper_policy_forward.1} parent=0
    _
  %s20 = ssub.s32 1, %s18
  %s21 = scalar_select 0, %s20, %s18
  // Predicated region
  $region2: #{hyper_policy_forward.1} parent=0 // pred_check
    _
  $region3: #{hyper_policy_forward.1} parent=0 // pred_check_branch
    %23 = sbr.rel (0) target = $region5
  $region4: #{hyper_policy_forward.1} parent=0 // pred_region
    _
  $region5: #{hyper_policy_forward.1} parent=0 // pred_fallthru
    _
  // Predicated region
  $region6: #{hyper_policy_forward.1} parent=0 // pred_check
    _
  $region7: #{hyper_policy_forward.1} parent=0 // pred_check_branch
    %25 = sbr.rel (0) target = $region9
  $region8: #{hyper_policy_forward.1} parent=0 // pred_region
    _
  $region9: #{hyper_policy_forward.1} parent=0 // pred_fallthru
    _
  // Predicated region
  $region10: #{hyper_policy_forward.1} parent=0 // pred_check
    _
  $region11: #{hyper_policy_forward.1} parent=0 // pred_check_branch
    %27 = sbr.rel (0) target = $region13
  $region12: #{hyper_policy_forward.1} parent=0 // pred_region
    _
  $region13: #{hyper_policy_forward.1} parent=0 // pred_fallthru
    _
  // Predicated region
  $region14: #{hyper_policy_forward.1} parent=0 // pred_check
    _
  $region15: #{hyper_policy_forward.1} parent=0 // pred_check_branch
    %29 = sbr.rel (0) target = $region17
  $region16: #{hyper_policy_forward.1} parent=0 // pred_region
    _
  $region17: #{hyper_policy_forward.1} parent=0 // pred_fallthru
    _
  // Predicated region
  $region18: #{hyper_policy_forward.1} parent=0 // pred_check
    _
  $region19: #{hyper_policy_forward.1} parent=0 // pred_check_branch
    %31 = sbr.rel (0) target = $region21
  $region20: #{hyper_policy_forward.1} parent=0 // pred_region
    _
  $region21: #{hyper_policy_forward.1} parent=0 // pred_fallthru
    _
  // Predicated region
  $region22: #{hyper_policy_forward.1} parent=0 // pred_check
    _
  $region23: #{hyper_policy_forward.1} parent=0 // pred_check_branch
    %33 = sbr.rel (0) target = $region25
  $region24: #{hyper_policy_forward.1} parent=0 // pred_region
    _
  $region25: #{hyper_policy_forward.1} parent=0 // pred_fallthru
    _
  // Predicated region
  $region26: #{hyper_policy_forward.1} parent=0 // pred_check
    _
  $region27: #{hyper_policy_forward.1} parent=0 // pred_check_branch
    %35 = sbr.rel (0) target = $region29
  $region28: #{hyper_policy_forward.1} parent=0 // pred_region
    _
  $region29: #{hyper_policy_forward.1} parent=0 // pred_fallthru
    _
  // Predicated region
  $region30: #{hyper_policy_forward.1} parent=0 // pred_check
    _
  $region31: #{hyper_policy_forward.1} parent=0 // pred_check_branch
    %37 = sbr.rel (0) target = $region33
  $region32: #{hyper_policy_forward.1} parent=0 // pred_region
    _
  $region33: #{hyper_policy_forward.1} parent=0 // pred_fallthru
    _
  // Predicated region
  $region34: #{hyper_policy_forward.1} parent=0 // pred_check
    _
  $region35: #{hyper_policy_forward.1} parent=0 // pred_check_branch
    %39 = sbr.rel (0) target = $region37
  $region36: #{hyper_policy_forward.1} parent=0 // pred_region
    _
  $region37: #{hyper_policy_forward.1} parent=0 // pred_fallthru
    _
  // Predicated region
  $region38: #{hyper_policy_forward.1} parent=0 // pred_check
    _
  $region39: #{hyper_policy_forward.1} parent=0 // pred_check_branch
    %41 = sbr.rel (0) target = $region41
  $region40: #{hyper_policy_forward.1} parent=0 // pred_region
    _
  $region41: #{hyper_policy_forward.1} parent=0 // pred_fallthru
    _
  // Predicated region
  $region42: #{hyper_policy_forward.1} parent=0 // pred_check
    _
  $region43: #{hyper_policy_forward.1} parent=0 // pred_check_branch
    %43 = sbr.rel (0) target = $region45
  $region44: #{hyper_policy_forward.1} parent=0 // pred_region
    _
  $region45: #{hyper_policy_forward.1} parent=0 // pred_fallthru
    _
  // Predicated region
  $region46: #{hyper_policy_forward.1} parent=0 // pred_check
    _
  $region47: #{hyper_policy_forward.1} parent=0 // pred_check_branch
    %45 = sbr.rel (0) target = $region49
  $region48: #{hyper_policy_forward.1} parent=0 // pred_region
    _
  $region49: #{hyper_policy_forward.1} parent=0 // pred_fallthru
    _
  // Predicated region
  $region50: #{hyper_policy_forward.1} parent=0 // pred_check
    _
  $region51: #{hyper_policy_forward.1} parent=0 // pred_check_branch
    %47 = sbr.rel (0) target = $region53
  $region52: #{hyper_policy_forward.1} parent=0 // pred_region
    _
  $region53: #{hyper_policy_forward.1} parent=0 // pred_fallthru
    _
  // Predicated region
  $region54: #{hyper_policy_forward.1} parent=0 // pred_check
    _
  $region55: #{hyper_policy_forward.1} parent=0 // pred_check_branch
    %49 = sbr.rel (0) target = $region57
  $region56: #{hyper_policy_forward.1} parent=0 // pred_region
    _
  $region57: #{hyper_policy_forward.1} parent=0 // pred_fallthru
    _
  // Predicated region
  $region58: #{hyper_policy_forward.1} parent=0 // pred_check
    _
  $region59: #{hyper_policy_forward.1} parent=0 // pred_check_branch
    %51 = sbr.rel (0) target = $region61
  $region60: #{hyper_policy_forward.1} parent=0 // pred_region
    _
  $region61: #{hyper_policy_forward.1} parent=0 // pred_fallthru
    _
  // Predicated region
  $region62: #{hyper_policy_forward.1} parent=0 // pred_check
    _
  $region63: #{hyper_policy_forward.1} parent=0 // pred_check_branch
    %53 = sbr.rel (0) target = $region65
  $region64: #{hyper_policy_forward.1} parent=0 // pred_region
    _
  $region65: #{hyper_policy_forward.1} parent=0 // pred_fallthru
    _
  // Predicated region
  $region66: #{hyper_policy_forward.1} parent=0 // pred_check
    _
  $region67: #{hyper_policy_forward.1} parent=0 // pred_check_branch
    %55 = sbr.rel (0) target = $region69
  $region68: #{hyper_policy_forward.1} parent=0 // pred_region
    _
  $region69: #{hyper_policy_forward.1} parent=0 // pred_fallthru
    _
  %v57 = vld [vmem:[%s0] sm:$0xf]
  %v58 = vld [vmem:[%s1] sm:$0xf]
  %v59 = vld [vmem:[%s2] sm:$0xff]
  %v60 = vld [vmem:[%s3] sm:$0xf]
  %v61 = vld [vmem:[%s4] sm:$0x1]
  %v63 = vlaneseq
  %v64 = vshrl.u32 %v63, 7
  %v65 = vsub.s32 0, %v64
  %v66 = vrot.slane %v61, %v65
  %vm68 = vcmask 64512
  %v70 = vsel %vm68, %v57, 0
  %vm72 = vcmask 1043456
  %v74 = vsel %vm72, %v60, 0
  %76 = vmatprep.subr.bf16.mxu0 0
  %77 = vmatpush1.bf16.msra.mxu0 %v74
  %78 = vmatprep.subr.bf16.mxu0 0
  %79 = vmatpush1.bf16.msra.mxu0 0
  %80 = vmatprep.subr.bf16.mxu0 0
  %81 = vmatpush1.bf16.msra.mxu0 0
  %82 = vmatprep.subr.bf16.mxu0 0
  %83 = vmatpush1.bf16.msra.mxu0 0
  %84 = vmatprep.subr.bf16.mxu0 0
  %85 = vmatpush1.bf16.msra.mxu0 0
  %86 = vmatprep.subr.bf16.mxu0 0
  %87 = vmatpush1.bf16.msra.mxu0 0
  %88 = vmatprep.subr.bf16.mxu0 0
  %89 = vmatpush1.bf16.msra.mxu0 0
  %90 = vmatprep.subr.bf16.mxu0 0
  %91 = vmatpush1.bf16.msra.mxu0 0
  %92 = vmatprep.subr.bf16.mxu0 0
  %93 = vmatpush1.bf16.msra.mxu0 0
  %94 = vmatprep.subr.bf16.mxu0 0
  %95 = vmatpush1.bf16.msra.mxu0 0
  %96 = vmatprep.subr.bf16.mxu0 0
  %97 = vmatpush1.bf16.msra.mxu0 0
  %98 = vmatprep.subr.bf16.mxu0 0
  %99 = vmatpush1.bf16.msra.mxu0 0
  %100 = vmatprep.subr.bf16.mxu0 0
  %101 = vmatpush1.bf16.msra.mxu0 0
  %102 = vmatprep.subr.bf16.mxu0 0
  %103 = vmatpush1.bf16.msra.mxu0 0
  %104 = vmatprep.subr.bf16.mxu0 0
  %105 = vmatpush1.bf16.msra.mxu0 0
  %106 = vmatprep.subr.bf16.mxu0 0
  %107 = vmatpush1.bf16.msra.mxu0 0
  %108 = vmatprep.mubr.bf16.mxu0 0
  %109 = vmatmul.mubr.bf16.gmra.mrb[0].mxu0 %v70
  %v110 = vpop.f32.mrb[0].mxu0
  %v111 = vadd.f32 %v66, %v110
  %v112 = vpop.f32.mrb[0].mxu0
  %v113 = vpop.f32.mrb[0].mxu0
  %v114 = vpop.f32.mrb[0].mxu0
  %115 = vdwg.mxu0
  %v116 = vmax.f32 %v111, 0.0
  %v117 = vpack.c.bf16 %v116, %v116
  %v118 = vld [vmem:[%s5] sm:$0xff]
  %v119 = vld [vmem:[%s5 + $0x8] sm:$0xff]
  %v120 = vld [vmem:[%s5 + $0x10] sm:$0xff]
  %v121 = vld [vmem:[%s5 + $0x18] sm:$0xff]
  %v126 = vunpack.c.l.b16 %v118
  %v127 = vunpack.c.h.b16 %v118
  %v128 = vunpack.c.l.b16 %v119
  %v129 = vunpack.c.h.b16 %v119
  %v130 = vunpack.c.l.b16 %v120
  %v131 = vunpack.c.h.b16 %v120
  %v132 = vunpack.c.l.b16 %v121
  %v133 = vunpack.c.h.b16 %v121
  %v134 = vpack.c.b16 %v130, %v126
  %v135 = vpack.c.b16 %v131, %v127
  %v136 = vpack.c.b16 %v132, %v128
  %v137 = vpack.c.b16 %v133, %v129
  %vm142 = vcmask 130048
  %v144 = vsel %vm142, %v58, 0
  %146 = vmatprep.subr.bf16.mxu0 %v135
  %147 = vmatpush1.bf16.msra.mxu0 %v134
  %148 = vmatprep.subr.bf16.mxu0 0
  %149 = vmatpush1.bf16.msra.mxu0 0
  %150 = vmatprep.subr.bf16.mxu0 0
  %151 = vmatpush1.bf16.msra.mxu0 0
  %152 = vmatprep.subr.bf16.mxu0 0
  %153 = vmatpush1.bf16.msra.mxu0 0
  %154 = vmatprep.subr.bf16.mxu0 0
  %155 = vmatpush1.bf16.msra.mxu0 0
  %156 = vmatprep.subr.bf16.mxu0 0
  %157 = vmatpush1.bf16.msra.mxu0 0
  %158 = vmatprep.subr.bf16.mxu0 0
  %159 = vmatpush1.bf16.msra.mxu0 0
  %160 = vmatprep.subr.bf16.mxu0 0
  %161 = vmatpush1.bf16.msra.mxu0 0
  %162 = vmatprep.subr.bf16.mxu0 0
  %163 = vmatpush1.bf16.msra.mxu0 0
  %164 = vmatprep.subr.bf16.mxu0 0
  %165 = vmatpush1.bf16.msra.mxu0 0
  %166 = vmatprep.subr.bf16.mxu0 0
  %167 = vmatpush1.bf16.msra.mxu0 0
  %168 = vmatprep.subr.bf16.mxu0 0
  %169 = vmatpush1.bf16.msra.mxu0 0
  %170 = vmatprep.subr.bf16.mxu0 0
  %171 = vmatpush1.bf16.msra.mxu0 0
  %172 = vmatprep.subr.bf16.mxu0 0
  %173 = vmatpush1.bf16.msra.mxu0 0
  %174 = vmatprep.subr.bf16.mxu0 0
  %175 = vmatpush1.bf16.msra.mxu0 0
  %176 = vmatprep.subr.bf16.mxu0 0
  %177 = vmatpush1.bf16.msra.mxu0 0
  %178 = vmatprep.mubr.bf16.mxu0 0
  %179 = vmatmul.mubr.bf16.gmra.mrb[0].mxu0 %v144
  %v180 = vpop.f32.mrb[0].mxu0
  %v181 = vadd.f32 0.0, %v180
  %v182 = vpop.f32.mrb[0].mxu0
  %v183 = vadd.f32 0.0, %v182
  %v184 = vpop.f32.mrb[0].mxu0
  %v185 = vpop.f32.mrb[0].mxu0
  %186 = vdwg.mxu0
  %187 = vmatprep.subr.bf16.mxu0 %v137
  %188 = vmatpush1.bf16.msra.mxu0 %v136
  %189 = vmatprep.subr.bf16.mxu0 0
  %190 = vmatpush1.bf16.msra.mxu0 0
  %191 = vmatprep.subr.bf16.mxu0 0
  %192 = vmatpush1.bf16.msra.mxu0 0
  %193 = vmatprep.subr.bf16.mxu0 0
  %194 = vmatpush1.bf16.msra.mxu0 0
  %195 = vmatprep.subr.bf16.mxu0 0
  %196 = vmatpush1.bf16.msra.mxu0 0
  %197 = vmatprep.subr.bf16.mxu0 0
  %198 = vmatpush1.bf16.msra.mxu0 0
  %199 = vmatprep.subr.bf16.mxu0 0
  %200 = vmatpush1.bf16.msra.mxu0 0
  %201 = vmatprep.subr.bf16.mxu0 0
  %202 = vmatpush1.bf16.msra.mxu0 0
  %203 = vmatprep.subr.bf16.mxu0 0
  %204 = vmatpush1.bf16.msra.mxu0 0
  %205 = vmatprep.subr.bf16.mxu0 0
  %206 = vmatpush1.bf16.msra.mxu0 0
  %207 = vmatprep.subr.bf16.mxu0 0
  %208 = vmatpush1.bf16.msra.mxu0 0
  %209 = vmatprep.subr.bf16.mxu0 0
  %210 = vmatpush1.bf16.msra.mxu0 0
  %211 = vmatprep.subr.bf16.mxu0 0
  %212 = vmatpush1.bf16.msra.mxu0 0
  %213 = vmatprep.subr.bf16.mxu0 0
  %214 = vmatpush1.bf16.msra.mxu0 0
  %215 = vmatprep.subr.bf16.mxu0 0
  %216 = vmatpush1.bf16.msra.mxu0 0
  %217 = vmatprep.subr.bf16.mxu0 0
  %218 = vmatpush1.bf16.msra.mxu0 0
  %219 = vmatprep.mubr.bf16.mxu0 0
  %220 = vmatmul.mubr.bf16.gmra.mrb[0].mxu0 %v144
  %v221 = vpop.f32.mrb[0].mxu0
  %v222 = vadd.f32 0.0, %v221
  %v223 = vpop.f32.mrb[0].mxu0
  %v224 = vadd.f32 0.0, %v223
  %v225 = vpop.f32.mrb[0].mxu0
  %v226 = vpop.f32.mrb[0].mxu0
  %227 = vdwg.mxu0
  %v228 = vld [vmem:[%s6] sm:$0xff]
  %v229 = vld [vmem:[%s6 + $0x8] sm:$0xff]
  %v230 = vld [vmem:[%s6 + $0x10] sm:$0xff]
  %v231 = vld [vmem:[%s6 + $0x18] sm:$0xff]
  %v232 = vld [vmem:[%s6 + $0x20] sm:$0xff]
  %v233 = vld [vmem:[%s6 + $0x28] sm:$0xff]
  %v234 = vld [vmem:[%s6 + $0x30] sm:$0xff]
  %v235 = vld [vmem:[%s6 + $0x38] sm:$0xff]
  %v244 = vunpack.c.l.b16 %v228
  %v245 = vunpack.c.h.b16 %v228
  %v246 = vunpack.c.l.b16 %v229
  %v247 = vunpack.c.h.b16 %v229
  %v248 = vunpack.c.l.b16 %v230
  %v249 = vunpack.c.h.b16 %v230
  %v250 = vunpack.c.l.b16 %v231
  %v251 = vunpack.c.h.b16 %v231
  %v252 = vunpack.c.l.b16 %v232
  %v253 = vunpack.c.h.b16 %v232
  %v254 = vunpack.c.l.b16 %v233
  %v255 = vunpack.c.h.b16 %v233
  %v256 = vunpack.c.l.b16 %v234
  %v257 = vunpack.c.h.b16 %v234
  %v258 = vunpack.c.l.b16 %v235
  %v259 = vunpack.c.h.b16 %v235
  %v260 = vpack.c.b16 %v248, %v244
  %v261 = vpack.c.b16 %v249, %v245
  %v262 = vpack.c.b16 %v250, %v246
  %v263 = vpack.c.b16 %v251, %v247
  %v264 = vpack.c.b16 %v256, %v252
  %v265 = vpack.c.b16 %v257, %v253
  %v266 = vpack.c.b16 %v258, %v254
  %v267 = vpack.c.b16 %v259, %v255
  %vm276 = vcmask 261120
  %v278 = vsel %vm276, %v117, 0
  %280 = vmatprep.subr.bf16.mxu0 %v261
  %281 = vmatpush1.bf16.msra.mxu0 %v260
  %282 = vmatprep.subr.bf16.mxu0 %v265
  %283 = vmatpush1.bf16.msra.mxu0 %v264
  %284 = vmatprep.subr.bf16.mxu0 0
  %285 = vmatpush1.bf16.msra.mxu0 0
  %286 = vmatprep.subr.bf16.mxu0 0
  %287 = vmatpush1.bf16.msra.mxu0 0
  %288 = vmatprep.subr.bf16.mxu0 0
  %289 = vmatpush1.bf16.msra.mxu0 0
  %290 = vmatprep.subr.bf16.mxu0 0
  %291 = vmatpush1.bf16.msra.mxu0 0
  %292 = vmatprep.subr.bf16.mxu0 0
  %293 = vmatpush1.bf16.msra.mxu0 0
  %294 = vmatprep.subr.bf16.mxu0 0
  %295 = vmatpush1.bf16.msra.mxu0 0
  %296 = vmatprep.subr.bf16.mxu0 0
  %297 = vmatpush1.bf16.msra.mxu0 0
  %298 = vmatprep.subr.bf16.mxu0 0
  %299 = vmatpush1.bf16.msra.mxu0 0
  %300 = vmatprep.subr.bf16.mxu0 0
  %301 = vmatpush1.bf16.msra.mxu0 0
  %302 = vmatprep.subr.bf16.mxu0 0
  %303 = vmatpush1.bf16.msra.mxu0 0
  %304 = vmatprep.subr.bf16.mxu0 0
  %305 = vmatpush1.bf16.msra.mxu0 0
  %306 = vmatprep.subr.bf16.mxu0 0
  %307 = vmatpush1.bf16.msra.mxu0 0
  %308 = vmatprep.subr.bf16.mxu0 0
  %309 = vmatpush1.bf16.msra.mxu0 0
  %310 = vmatprep.subr.bf16.mxu0 0
  %311 = vmatpush1.bf16.msra.mxu0 0
  %312 = vmatprep.mubr.bf16.mxu0 0
  %313 = vmatmul.mubr.bf16.gmra.mrb[0].mxu0 %v278
  %v314 = vpop.f32.mrb[0].mxu0
  %v315 = vadd.f32 0.0, %v314
  %v316 = vpop.f32.mrb[0].mxu0
  %v317 = vadd.f32 0.0, %v316
  %v318 = vpop.f32.mrb[0].mxu0
  %v319 = vpop.f32.mrb[0].mxu0
  %320 = vdwg.mxu0
  %321 = vmatprep.subr.bf16.mxu0 %v263
  %322 = vmatpush1.bf16.msra.mxu0 %v262
  %323 = vmatprep.subr.bf16.mxu0 %v267
  %324 = vmatpush1.bf16.msra.mxu0 %v266
  %325 = vmatprep.subr.bf16.mxu0 0
  %326 = vmatpush1.bf16.msra.mxu0 0
  %327 = vmatprep.subr.bf16.mxu0 0
  %328 = vmatpush1.bf16.msra.mxu0 0
  %329 = vmatprep.subr.bf16.mxu0 0
  %330 = vmatpush1.bf16.msra.mxu0 0
  %331 = vmatprep.subr.bf16.mxu0 0
  %332 = vmatpush1.bf16.msra.mxu0 0
  %333 = vmatprep.subr.bf16.mxu0 0
  %334 = vmatpush1.bf16.msra.mxu0 0
  %335 = vmatprep.subr.bf16.mxu0 0
  %336 = vmatpush1.bf16.msra.mxu0 0
  %337 = vmatprep.subr.bf16.mxu0 0
  %338 = vmatpush1.bf16.msra.mxu0 0
  %339 = vmatprep.subr.bf16.mxu0 0
  %340 = vmatpush1.bf16.msra.mxu0 0
  %341 = vmatprep.subr.bf16.mxu0 0
  %342 = vmatpush1.bf16.msra.mxu0 0
  %343 = vmatprep.subr.bf16.mxu0 0
  %344 = vmatpush1.bf16.msra.mxu0 0
  %345 = vmatprep.subr.bf16.mxu0 0
  %346 = vmatpush1.bf16.msra.mxu0 0
  %347 = vmatprep.subr.bf16.mxu0 0
  %348 = vmatpush1.bf16.msra.mxu0 0
  %349 = vmatprep.subr.bf16.mxu0 0
  %350 = vmatpush1.bf16.msra.mxu0 0
  %351 = vmatprep.subr.bf16.mxu0 0
  %352 = vmatpush1.bf16.msra.mxu0 0
  %353 = vmatprep.mubr.bf16.mxu0 0
  %354 = vmatmul.mubr.bf16.gmra.mrb[0].mxu0 %v278
  %v355 = vpop.f32.mrb[0].mxu0
  %v356 = vadd.f32 0.0, %v355
  %v357 = vpop.f32.mrb[0].mxu0
  %v358 = vadd.f32 0.0, %v357
  %v359 = vpop.f32.mrb[0].mxu0
  %v360 = vpop.f32.mrb[0].mxu0
  %361 = vdwg.mxu0
  %v362 = vmul.f32 %v181, %v315
  %v363 = vmul.f32 %v183, %v317
  %v364 = vmul.f32 %v222, %v356
  %v365 = vmul.f32 %v224, %v358
  %v366 = vpack.c.bf16 %v362, %v362
  %v367 = vpack.c.bf16 %v363, %v363
  %v368 = vpack.c.bf16 %v364, %v364
  %v369 = vpack.c.bf16 %v365, %v365
  %v370 = vld [vmem:[%s7] sm:$0xf]
  %v371 = vld [vmem:[%s7 + $0x4] sm:$0xf]
  %v372 = vld [vmem:[%s7 + $0x8] sm:$0xf]
  %v373 = vld [vmem:[%s7 + $0xc] sm:$0xf]
  %v374 = vld [vmem:[%s7 + $0x10] sm:$0xf]
  %v375 = vld [vmem:[%s7 + $0x14] sm:$0xf]
  %v376 = vld [vmem:[%s7 + $0x18] sm:$0xf]
  %v377 = vld [vmem:[%s7 + $0x1c] sm:$0xf]
  %v378 = vld [vmem:[%s7 + $0x20] sm:$0xf]
  %v379 = vld [vmem:[%s7 + $0x24] sm:$0xf]
  %v380 = vld [vmem:[%s7 + $0x28] sm:$0xf]
  %v381 = vld [vmem:[%s7 + $0x2c] sm:$0xf]
  %v382 = vld [vmem:[%s7 + $0x30] sm:$0xf]
  %v383 = vld [vmem:[%s7 + $0x34] sm:$0xf]
  %v384 = vld [vmem:[%s7 + $0x38] sm:$0xf]
  %v385 = vld [vmem:[%s7 + $0x3c] sm:$0xf]
  %v386 = vld [vmem:[%s7 + $0x40] sm:$0xf]
  %v387 = vld [vmem:[%s7 + $0x44] sm:$0xf]
  %v388 = vld [vmem:[%s7 + $0x48] sm:$0xf]
  %v389 = vld [vmem:[%s7 + $0x4c] sm:$0xf]
  %v390 = vld [vmem:[%s7 + $0x50] sm:$0xf]
  %v391 = vld [vmem:[%s7 + $0x54] sm:$0xf]
  %v392 = vld [vmem:[%s7 + $0x58] sm:$0xf]
  %v393 = vld [vmem:[%s7 + $0x5c] sm:$0xf]
  %v394 = vld [vmem:[%s7 + $0x60] sm:$0xf]
  %v395 = vld [vmem:[%s7 + $0x64] sm:$0xf]
  %v396 = vld [vmem:[%s7 + $0x68] sm:$0xf]
  %v397 = vld [vmem:[%s7 + $0x6c] sm:$0xf]
  %v398 = vld [vmem:[%s7 + $0x70] sm:$0xf]
  %v399 = vld [vmem:[%s7 + $0x74] sm:$0xf]
  %v400 = vld [vmem:[%s7 + $0x78] sm:$0xf]
  %v401 = vld [vmem:[%s7 + $0x7c] sm:$0xf]
  %v402 = vld [vmem:[%s7 + $0x80] sm:$0xf]
  %v403 = vld [vmem:[%s7 + $0x84] sm:$0xf]
  %v404 = vld [vmem:[%s7 + $0x88] sm:$0xf]
  %v405 = vld [vmem:[%s7 + $0x8c] sm:$0xf]
  %v406 = vld [vmem:[%s7 + $0x90] sm:$0xf]
  %v407 = vld [vmem:[%s7 + $0x94] sm:$0xf]
  %v408 = vld [vmem:[%s7 + $0x98] sm:$0xf]
  %v409 = vld [vmem:[%s7 + $0x9c] sm:$0xf]
  %v410 = vld [vmem:[%s7 + $0xa0] sm:$0xf]
  %v411 = vld [vmem:[%s7 + $0xa4] sm:$0xf]
  %v412 = vld [vmem:[%s7 + $0xa8] sm:$0xf]
  %v413 = vld [vmem:[%s7 + $0xac] sm:$0xf]
  %v414 = vld [vmem:[%s7 + $0xb0] sm:$0xf]
  %v415 = vld [vmem:[%s7 + $0xb4] sm:$0xf]
  %v416 = vld [vmem:[%s7 + $0xb8] sm:$0xf]
  %v417 = vld [vmem:[%s7 + $0xbc] sm:$0xf]
  %v418 = vld [vmem:[%s7 + $0xc0] sm:$0xf]
  %v419 = vld [vmem:[%s7 + $0xc4] sm:$0xf]
  %v420 = vld [vmem:[%s7 + $0xc8] sm:$0xf]
  %v421 = vld [vmem:[%s7 + $0xcc] sm:$0xf]
  %v422 = vld [vmem:[%s7 + $0xd0] sm:$0xf]
  %v423 = vld [vmem:[%s7 + $0xd4] sm:$0xf]
  %v424 = vld [vmem:[%s7 + $0xd8] sm:$0xf]
  %v425 = vld [vmem:[%s7 + $0xdc] sm:$0xf]
  %v426 = vld [vmem:[%s7 + $0xe0] sm:$0xf]
  %v427 = vld [vmem:[%s7 + $0xe4] sm:$0xf]
  %v428 = vld [vmem:[%s7 + $0xe8] sm:$0xf]
  %v429 = vld [vmem:[%s7 + $0xec] sm:$0xf]
  %v430 = vld [vmem:[%s7 + $0xf0] sm:$0xf]
  %v431 = vld [vmem:[%s7 + $0xf4] sm:$0xf]
  %v432 = vld [vmem:[%s7 + $0xf8] sm:$0xf]
  %v433 = vld [vmem:[%s7 + $0xfc] sm:$0xf]
  %v434 = vld [vmem:[%s8] sm:$0xf]
  %v435 = vld [vmem:[%s8 + $0x4] sm:$0xf]
  %v438 = vunpack.c.l.b16 %v434
  %v439 = vunpack.c.l.b16 %v435
  %v440 = vpack.c.b16 %v439, %v438
  %442 = vmatprep.subr.bf16.mxu0 0
  %443 = vmatpush1.bf16.msra.mxu0 %v440
  %444 = vmatprep.subr.bf16.mxu0 0
  %445 = vmatpush1.bf16.msra.mxu0 0
  %446 = vmatprep.subr.bf16.mxu0 0
  %447 = vmatpush1.bf16.msra.mxu0 0
  %448 = vmatprep.subr.bf16.mxu0 0
  %449 = vmatpush1.bf16.msra.mxu0 0
  %450 = vmatprep.subr.bf16.mxu0 0
  %451 = vmatpush1.bf16.msra.mxu0 0
  %452 = vmatprep.subr.bf16.mxu0 0
  %453 = vmatpush1.bf16.msra.mxu0 0
  %454 = vmatprep.subr.bf16.mxu0 0
  %455 = vmatpush1.bf16.msra.mxu0 0
  %456 = vmatprep.subr.bf16.mxu0 0
  %457 = vmatpush1.bf16.msra.mxu0 0
  %458 = vmatprep.subr.bf16.mxu0 0
  %459 = vmatpush1.bf16.msra.mxu0 0
  %460 = vmatprep.subr.bf16.mxu0 0
  %461 = vmatpush1.bf16.msra.mxu0 0
  %462 = vmatprep.subr.bf16.mxu0 0
  %463 = vmatpush1.bf16.msra.mxu0 0
  %464 = vmatprep.subr.bf16.mxu0 0
  %465 = vmatpush1.bf16.msra.mxu0 0
  %466 = vmatprep.subr.bf16.mxu0 0
  %467 = vmatpush1.bf16.msra.mxu0 0
  %468 = vmatprep.subr.bf16.mxu0 0
  %469 = vmatpush1.bf16.msra.mxu0 0
  %470 = vmatprep.subr.bf16.mxu0 0
  %471 = vmatpush1.bf16.msra.mxu0 0
  %472 = vmatprep.subr.bf16.mxu0 0
  %473 = vmatpush1.bf16.msra.mxu0 0
  %474 = vmatprep.mubr.bf16.mxu0 0
  %475 = vmatmul.mubr.bf16.gmra.mrb[0].mxu0 %v144
  %v476 = vpop.f32.mrb[0].mxu0
  %v477 = vadd.f32 0.0, %v476
  %v478 = vpop.f32.mrb[0].mxu0
  %v479 = vpop.f32.mrb[0].mxu0
  %v480 = vpop.f32.mrb[0].mxu0
  %481 = vdwg.mxu0
  %v546 = vunpack.c.l.b16 %v370
  %v547 = vunpack.c.l.b16 %v371
  %v548 = vunpack.c.l.b16 %v372
  %v549 = vunpack.c.l.b16 %v373
  %v550 = vunpack.c.l.b16 %v374
  %v551 = vunpack.c.l.b16 %v375
  %v552 = vunpack.c.l.b16 %v376
  %v553 = vunpack.c.l.b16 %v377
  %v554 = vunpack.c.l.b16 %v378
  %v555 = vunpack.c.l.b16 %v379
  %v556 = vunpack.c.l.b16 %v380
  %v557 = vunpack.c.l.b16 %v381
  %v558 = vunpack.c.l.b16 %v382
  %v559 = vunpack.c.l.b16 %v383
  %v560 = vunpack.c.l.b16 %v384
  %v561 = vunpack.c.l.b16 %v385
  %v562 = vunpack.c.l.b16 %v386
  %v563 = vunpack.c.l.b16 %v387
  %v564 = vunpack.c.l.b16 %v388
  %v565 = vunpack.c.l.b16 %v389
  %v566 = vunpack.c.l.b16 %v390
  %v567 = vunpack.c.l.b16 %v391
  %v568 = vunpack.c.l.b16 %v392
  %v569 = vunpack.c.l.b16 %v393
  %v570 = vunpack.c.l.b16 %v394
  %v571 = vunpack.c.l.b16 %v395
  %v572 = vunpack.c.l.b16 %v396
  %v573 = vunpack.c.l.b16 %v397
  %v574 = vunpack.c.l.b16 %v398
  %v575 = vunpack.c.l.b16 %v399
  %v576 = vunpack.c.l.b16 %v400
  %v577 = vunpack.c.l.b16 %v401
  %v578 = vunpack.c.l.b16 %v402
  %v579 = vunpack.c.l.b16 %v403
  %v580 = vunpack.c.l.b16 %v404
  %v581 = vunpack.c.l.b16 %v405
  %v582 = vunpack.c.l.b16 %v406
  %v583 = vunpack.c.l.b16 %v407
  %v584 = vunpack.c.l.b16 %v408
  %v585 = vunpack.c.l.b16 %v409
  %v586 = vunpack.c.l.b16 %v410
  %v587 = vunpack.c.l.b16 %v411
  %v588 = vunpack.c.l.b16 %v412
  %v589 = vunpack.c.l.b16 %v413
  %v590 = vunpack.c.l.b16 %v414
  %v591 = vunpack.c.l.b16 %v415
  %v592 = vunpack.c.l.b16 %v416
  %v593 = vunpack.c.l.b16 %v417
  %v594 = vunpack.c.l.b16 %v418
  %v595 = vunpack.c.l.b16 %v419
  %v596 = vunpack.c.l.b16 %v420
  %v597 = vunpack.c.l.b16 %v421
  %v598 = vunpack.c.l.b16 %v422
  %v599 = vunpack.c.l.b16 %v423
  %v600 = vunpack.c.l.b16 %v424
  %v601 = vunpack.c.l.b16 %v425
  %v602 = vunpack.c.l.b16 %v426
  %v603 = vunpack.c.l.b16 %v427
  %v604 = vunpack.c.l.b16 %v428
  %v605 = vunpack.c.l.b16 %v429
  %v606 = vunpack.c.l.b16 %v430
  %v607 = vunpack.c.l.b16 %v431
  %v608 = vunpack.c.l.b16 %v432
  %v609 = vunpack.c.l.b16 %v433
  %v610 = vpack.c.b16 %v547, %v546
  %v611 = vpack.c.b16 %v549, %v548
  %v612 = vpack.c.b16 %v551, %v550
  %v613 = vpack.c.b16 %v553, %v552
  %v614 = vpack.c.b16 %v555, %v554
  %v615 = vpack.c.b16 %v557, %v556
  %v616 = vpack.c.b16 %v559, %v558
  %v617 = vpack.c.b16 %v561, %v560
  %v618 = vpack.c.b16 %v563, %v562
  %v619 = vpack.c.b16 %v565, %v564
  %v620 = vpack.c.b16 %v567, %v566
  %v621 = vpack.c.b16 %v569, %v568
  %v622 = vpack.c.b16 %v571, %v570
  %v623 = vpack.c.b16 %v573, %v572
  %v624 = vpack.c.b16 %v575, %v574
  %v625 = vpack.c.b16 %v577, %v576
  %v626 = vpack.c.b16 %v579, %v578
  %v627 = vpack.c.b16 %v581, %v580
  %v628 = vpack.c.b16 %v583, %v582
  %v629 = vpack.c.b16 %v585, %v584
  %v630 = vpack.c.b16 %v587, %v586
  %v631 = vpack.c.b16 %v589, %v588
  %v632 = vpack.c.b16 %v591, %v590
  %v633 = vpack.c.b16 %v593, %v592
  %v634 = vpack.c.b16 %v595, %v594
  %v635 = vpack.c.b16 %v597, %v596
  %v636 = vpack.c.b16 %v599, %v598
  %v637 = vpack.c.b16 %v601, %v600
  %v638 = vpack.c.b16 %v603, %v602
  %v639 = vpack.c.b16 %v605, %v604
  %v640 = vpack.c.b16 %v607, %v606
  %v641 = vpack.c.b16 %v609, %v608
  %674 = vmatprep.subr.bf16.mxu0 0
  %675 = vmatpush1.bf16.msra.mxu0 %v610
  %676 = vmatprep.subr.bf16.mxu0 0
  %677 = vmatpush1.bf16.msra.mxu0 %v611
  %678 = vmatprep.subr.bf16.mxu0 0
  %679 = vmatpush1.bf16.msra.mxu0 %v612
  %680 = vmatprep.subr.bf16.mxu0 0
  %681 = vmatpush1.bf16.msra.mxu0 %v613
  %682 = vmatprep.subr.bf16.mxu0 0
  %683 = vmatpush1.bf16.msra.mxu0 %v614
  %684 = vmatprep.subr.bf16.mxu0 0
  %685 = vmatpush1.bf16.msra.mxu0 %v615
  %686 = vmatprep.subr.bf16.mxu0 0
  %687 = vmatpush1.bf16.msra.mxu0 %v616
  %688 = vmatprep.subr.bf16.mxu0 0
  %689 = vmatpush1.bf16.msra.mxu0 %v617
  %690 = vmatprep.subr.bf16.mxu0 0
  %691 = vmatpush1.bf16.msra.mxu0 %v618
  %692 = vmatprep.subr.bf16.mxu0 0
  %693 = vmatpush1.bf16.msra.mxu0 %v619
  %694 = vmatprep.subr.bf16.mxu0 0
  %695 = vmatpush1.bf16.msra.mxu0 %v620
  %696 = vmatprep.subr.bf16.mxu0 0
  %697 = vmatpush1.bf16.msra.mxu0 %v621
  %698 = vmatprep.subr.bf16.mxu0 0
  %699 = vmatpush1.bf16.msra.mxu0 %v622
  %700 = vmatprep.subr.bf16.mxu0 0
  %701 = vmatpush1.bf16.msra.mxu0 %v623
  %702 = vmatprep.subr.bf16.mxu0 0
  %703 = vmatpush1.bf16.msra.mxu0 %v624
  %704 = vmatprep.subr.bf16.mxu0 0
  %705 = vmatpush1.bf16.msra.mxu0 %v625
  %706 = vmatprep.mubr.bf16.mxu0 %v367
  %707 = vmatmul.mubr.bf16.gmra.mrb[0].mxu0 %v366
  %v708 = vpop.f32.mrb[0].mxu0
  %v709 = vadd.f32 %v477, %v708
  %v710 = vpop.f32.mrb[0].mxu0
  %v711 = vpop.f32.mrb[0].mxu0
  %v712 = vpop.f32.mrb[0].mxu0
  %713 = vdwg.mxu0
  %714 = vmatprep.subr.bf16.mxu0 0
  %715 = vmatpush1.bf16.msra.mxu0 %v626
  %716 = vmatprep.subr.bf16.mxu0 0
  %717 = vmatpush1.bf16.msra.mxu0 %v627
  %718 = vmatprep.subr.bf16.mxu0 0
  %719 = vmatpush1.bf16.msra.mxu0 %v628
  %720 = vmatprep.subr.bf16.mxu0 0
  %721 = vmatpush1.bf16.msra.mxu0 %v629
  %722 = vmatprep.subr.bf16.mxu0 0
  %723 = vmatpush1.bf16.msra.mxu0 %v630
  %724 = vmatprep.subr.bf16.mxu0 0
  %725 = vmatpush1.bf16.msra.mxu0 %v631
  %726 = vmatprep.subr.bf16.mxu0 0
  %727 = vmatpush1.bf16.msra.mxu0 %v632
  %728 = vmatprep.subr.bf16.mxu0 0
  %729 = vmatpush1.bf16.msra.mxu0 %v633
  %730 = vmatprep.subr.bf16.mxu0 0
  %731 = vmatpush1.bf16.msra.mxu0 %v634
  %732 = vmatprep.subr.bf16.mxu0 0
  %733 = vmatpush1.bf16.msra.mxu0 %v635
  %734 = vmatprep.subr.bf16.mxu0 0
  %735 = vmatpush1.bf16.msra.mxu0 %v636
  %736 = vmatprep.subr.bf16.mxu0 0
  %737 = vmatpush1.bf16.msra.mxu0 %v637
  %738 = vmatprep.subr.bf16.mxu0 0
  %739 = vmatpush1.bf16.msra.mxu0 %v638
  %740 = vmatprep.subr.bf16.mxu0 0
  %741 = vmatpush1.bf16.msra.mxu0 %v639
  %742 = vmatprep.subr.bf16.mxu0 0
  %743 = vmatpush1.bf16.msra.mxu0 %v640
  %744 = vmatprep.subr.bf16.mxu0 0
  %745 = vmatpush1.bf16.msra.mxu0 %v641
  %746 = vmatprep.mubr.bf16.mxu0 %v369
  %747 = vmatmul.mubr.bf16.gmra.mrb[0].mxu0 %v368
  %v748 = vpop.f32.mrb[0].mxu0
  %v749 = vadd.f32 %v709, %v748
  %v750 = vpop.f32.mrb[0].mxu0
  %v751 = vpop.f32.mrb[0].mxu0
  %v752 = vpop.f32.mrb[0].mxu0
  %753 = vdwg.mxu0
  %v754 = vld [vmem:[%s9] sm:$0xf]
  %v755 = vld [vmem:[%s9 + $0x4] sm:$0xf]
  %v756 = vld [vmem:[%s9 + $0x8] sm:$0xf]
  %v757 = vld [vmem:[%s9 + $0xc] sm:$0xf]
  %v762 = vunpack.c.l.b16 %v754
  %v763 = vunpack.c.l.b16 %v755
  %v764 = vunpack.c.l.b16 %v756
  %v765 = vunpack.c.l.b16 %v757
  %v766 = vpack.c.b16 %v763, %v762
  %v767 = vpack.c.b16 %v765, %v764
  %770 = vmatprep.subr.bf16.mxu0 0
  %771 = vmatpush1.bf16.msra.mxu0 %v766
  %772 = vmatprep.subr.bf16.mxu0 0
  %773 = vmatpush1.bf16.msra.mxu0 %v767
  %774 = vmatprep.subr.bf16.mxu0 0
  %775 = vmatpush1.bf16.msra.mxu0 0
  %776 = vmatprep.subr.bf16.mxu0 0
  %777 = vmatpush1.bf16.msra.mxu0 0
  %778 = vmatprep.subr.bf16.mxu0 0
  %779 = vmatpush1.bf16.msra.mxu0 0
  %780 = vmatprep.subr.bf16.mxu0 0
  %781 = vmatpush1.bf16.msra.mxu0 0
  %782 = vmatprep.subr.bf16.mxu0 0
  %783 = vmatpush1.bf16.msra.mxu0 0
  %784 = vmatprep.subr.bf16.mxu0 0
  %785 = vmatpush1.bf16.msra.mxu0 0
  %786 = vmatprep.subr.bf16.mxu0 0
  %787 = vmatpush1.bf16.msra.mxu0 0
  %788 = vmatprep.subr.bf16.mxu0 0
  %789 = vmatpush1.bf16.msra.mxu0 0
  %790 = vmatprep.subr.bf16.mxu0 0
  %791 = vmatpush1.bf16.msra.mxu0 0
  %792 = vmatprep.subr.bf16.mxu0 0
  %793 = vmatpush1.bf16.msra.mxu0 0
  %794 = vmatprep.subr.bf16.mxu0 0
  %795 = vmatpush1.bf16.msra.mxu0 0
  %796 = vmatprep.subr.bf16.mxu0 0
  %797 = vmatpush1.bf16.msra.mxu0 0
  %798 = vmatprep.subr.bf16.mxu0 0
  %799 = vmatpush1.bf16.msra.mxu0 0
  %800 = vmatprep.subr.bf16.mxu0 0
  %801 = vmatpush1.bf16.msra.mxu0 0
  %802 = vmatprep.mubr.bf16.mxu0 0
  %803 = vmatmul.mubr.bf16.gmra.mrb[0].mxu0 %v278
  %v804 = vpop.f32.mrb[0].mxu0
  %v805 = vadd.f32 0.0, %v804
  %v806 = vpop.f32.mrb[0].mxu0
  %v807 = vpop.f32.mrb[0].mxu0
  %v808 = vpop.f32.mrb[0].mxu0
  %809 = vdwg.mxu0
  %v810 = vadd.f32 %v749, %v805
  %v811 = vld [vmem:[%s10] sm:$0x1]
  %v813 = vlaneseq
  %v814 = vshrl.u32 %v813, 7
  %v815 = vsub.s32 0, %v814
  %v816 = vrot.slane %v811, %v815
  %v818 = vadd.f32 %v810, %v816
  %v819 = vmax.f32 %v818, 0.0
  %v820 = vpack.c.bf16 %v819, %v819
  %v821 = vld [vmem:[%s11] sm:$0xff]
  %v822 = vld [vmem:[%s11 + $0x8] sm:$0xff]
  %v823 = vld [vmem:[%s11 + $0x10] sm:$0xff]
  %v824 = vld [vmem:[%s11 + $0x18] sm:$0xff]
  %v829 = vunpack.c.l.b16 %v821
  %v830 = vunpack.c.h.b16 %v821
  %v831 = vunpack.c.l.b16 %v822
  %v832 = vunpack.c.h.b16 %v822
  %v833 = vunpack.c.l.b16 %v823
  %v834 = vunpack.c.h.b16 %v823
  %v835 = vunpack.c.l.b16 %v824
  %v836 = vunpack.c.h.b16 %v824
  %v837 = vpack.c.b16 %v831, %v829
  %v838 = vpack.c.b16 %v832, %v830
  %v839 = vpack.c.b16 %v835, %v833
  %v840 = vpack.c.b16 %v836, %v834
  %v846 = vsel %vm276, %v820, 0
  %848 = vmatprep.subr.bf16.mxu0 %v838
  %849 = vmatpush1.bf16.msra.mxu0 %v837
  %850 = vmatprep.subr.bf16.mxu0 %v840
  %851 = vmatpush1.bf16.msra.mxu0 %v839
  %852 = vmatprep.subr.bf16.mxu0 0
  %853 = vmatpush1.bf16.msra.mxu0 0
  %854 = vmatprep.subr.bf16.mxu0 0
  %855 = vmatpush1.bf16.msra.mxu0 0
  %856 = vmatprep.subr.bf16.mxu0 0
  %857 = vmatpush1.bf16.msra.mxu0 0
  %858 = vmatprep.subr.bf16.mxu0 0
  %859 = vmatpush1.bf16.msra.mxu0 0
  %860 = vmatprep.subr.bf16.mxu0 0
  %861 = vmatpush1.bf16.msra.mxu0 0
  %862 = vmatprep.subr.bf16.mxu0 0
  %863 = vmatpush1.bf16.msra.mxu0 0
  %864 = vmatprep.subr.bf16.mxu0 0
  %865 = vmatpush1.bf16.msra.mxu0 0
  %866 = vmatprep.subr.bf16.mxu0 0
  %867 = vmatpush1.bf16.msra.mxu0 0
  %868 = vmatprep.subr.bf16.mxu0 0
  %869 = vmatpush1.bf16.msra.mxu0 0
  %870 = vmatprep.subr.bf16.mxu0 0
  %871 = vmatpush1.bf16.msra.mxu0 0
  %872 = vmatprep.subr.bf16.mxu0 0
  %873 = vmatpush1.bf16.msra.mxu0 0
  %874 = vmatprep.subr.bf16.mxu0 0
  %875 = vmatpush1.bf16.msra.mxu0 0
  %876 = vmatprep.subr.bf16.mxu0 0
  %877 = vmatpush1.bf16.msra.mxu0 0
  %878 = vmatprep.subr.bf16.mxu0 0
  %879 = vmatpush1.bf16.msra.mxu0 0
  %880 = vmatprep.mubr.bf16.mxu0 0
  %881 = vmatmul.mubr.bf16.gmra.mrb[0].mxu0 %v846
  %v882 = vpop.f32.mrb[0].mxu0
  %v883 = vadd.f32 0.0, %v882
  %v884 = vpop.f32.mrb[0].mxu0
  %v885 = vadd.f32 0.0, %v884
  %v886 = vpop.f32.mrb[0].mxu0
  %v887 = vpop.f32.mrb[0].mxu0
  %888 = vdwg.mxu0
  %v889 = vld [vmem:[%s12] sm:$0xff]
  %v890 = vld [vmem:[%s12 + $0x8] sm:$0xff]
  %v891 = vld [vmem:[%s12 + $0x10] sm:$0xff]
  %v892 = vld [vmem:[%s12 + $0x18] sm:$0xff]
  %v897 = vunpack.c.l.b16 %v889
  %v898 = vunpack.c.h.b16 %v889
  %v899 = vunpack.c.l.b16 %v890
  %v900 = vunpack.c.h.b16 %v890
  %v901 = vunpack.c.l.b16 %v891
  %v902 = vunpack.c.h.b16 %v891
  %v903 = vunpack.c.l.b16 %v892
  %v904 = vunpack.c.h.b16 %v892
  %v905 = vpack.c.b16 %v899, %v897
  %v906 = vpack.c.b16 %v900, %v898
  %v907 = vpack.c.b16 %v903, %v901
  %v908 = vpack.c.b16 %v904, %v902
  %913 = vmatprep.subr.bf16.mxu0 %v906
  %914 = vmatpush1.bf16.msra.mxu0 %v905
  %915 = vmatprep.subr.bf16.mxu0 %v908
  %916 = vmatpush1.bf16.msra.mxu0 %v907
  %917 = vmatprep.subr.bf16.mxu0 0
  %918 = vmatpush1.bf16.msra.mxu0 0
  %919 = vmatprep.subr.bf16.mxu0 0
  %920 = vmatpush1.bf16.msra.mxu0 0
  %921 = vmatprep.subr.bf16.mxu0 0
  %922 = vmatpush1.bf16.msra.mxu0 0
  %923 = vmatprep.subr.bf16.mxu0 0
  %924 = vmatpush1.bf16.msra.mxu0 0
  %925 = vmatprep.subr.bf16.mxu0 0
  %926 = vmatpush1.bf16.msra.mxu0 0
  %927 = vmatprep.subr.bf16.mxu0 0
  %928 = vmatpush1.bf16.msra.mxu0 0
  %929 = vmatprep.subr.bf16.mxu0 0
  %930 = vmatpush1.bf16.msra.mxu0 0
  %931 = vmatprep.subr.bf16.mxu0 0
  %932 = vmatpush1.bf16.msra.mxu0 0
  %933 = vmatprep.subr.bf16.mxu0 0
  %934 = vmatpush1.bf16.msra.mxu0 0
  %935 = vmatprep.subr.bf16.mxu0 0
  %936 = vmatpush1.bf16.msra.mxu0 0
  %937 = vmatprep.subr.bf16.mxu0 0
  %938 = vmatpush1.bf16.msra.mxu0 0
  %939 = vmatprep.subr.bf16.mxu0 0
  %940 = vmatpush1.bf16.msra.mxu0 0
  %941 = vmatprep.subr.bf16.mxu0 0
  %942 = vmatpush1.bf16.msra.mxu0 0
  %943 = vmatprep.subr.bf16.mxu0 0
  %944 = vmatpush1.bf16.msra.mxu0 0
  %945 = vmatprep.mubr.bf16.mxu0 0
  %946 = vmatmul.mubr.bf16.gmra.mrb[0].mxu0 %v278
  %v947 = vpop.f32.mrb[0].mxu0
  %v948 = vadd.f32 0.0, %v947
  %v949 = vpop.f32.mrb[0].mxu0
  %v950 = vadd.f32 0.0, %v949
  %v951 = vpop.f32.mrb[0].mxu0
  %v952 = vpop.f32.mrb[0].mxu0
  %953 = vdwg.mxu0
  %v954 = vmul.f32 %v883, %v948
  %v955 = vmul.f32 %v885, %v950
  %v956 = vpack.c.bf16 %v954, %v954
  %v957 = vpack.c.bf16 %v955, %v955
  %v958 = vld [vmem:[%s13] sm:$0xf]
  %v959 = vld [vmem:[%s13 + $0x4] sm:$0xf]
  %v960 = vld [vmem:[%s13 + $0x8] sm:$0xf]
  %v961 = vld [vmem:[%s13 + $0xc] sm:$0xf]
  %v962 = vld [vmem:[%s13 + $0x10] sm:$0xf]
  %v963 = vld [vmem:[%s13 + $0x14] sm:$0xf]
  %v964 = vld [vmem:[%s13 + $0x18] sm:$0xf]
  %v965 = vld [vmem:[%s13 + $0x1c] sm:$0xf]
  %v966 = vld [vmem:[%s13 + $0x20] sm:$0xf]
  %v967 = vld [vmem:[%s13 + $0x24] sm:$0xf]
  %v968 = vld [vmem:[%s13 + $0x28] sm:$0xf]
  %v969 = vld [vmem:[%s13 + $0x2c] sm:$0xf]
  %v970 = vld [vmem:[%s13 + $0x30] sm:$0xf]
  %v971 = vld [vmem:[%s13 + $0x34] sm:$0xf]
  %v972 = vld [vmem:[%s13 + $0x38] sm:$0xf]
  %v973 = vld [vmem:[%s13 + $0x3c] sm:$0xf]
  %v974 = vld [vmem:[%s13 + $0x40] sm:$0xf]
  %v975 = vld [vmem:[%s13 + $0x44] sm:$0xf]
  %v976 = vld [vmem:[%s13 + $0x48] sm:$0xf]
  %v977 = vld [vmem:[%s13 + $0x4c] sm:$0xf]
  %v978 = vld [vmem:[%s13 + $0x50] sm:$0xf]
  %v979 = vld [vmem:[%s13 + $0x54] sm:$0xf]
  %v980 = vld [vmem:[%s13 + $0x58] sm:$0xf]
  %v981 = vld [vmem:[%s13 + $0x5c] sm:$0xf]
  %v982 = vld [vmem:[%s13 + $0x60] sm:$0xf]
  %v983 = vld [vmem:[%s13 + $0x64] sm:$0xf]
  %v984 = vld [vmem:[%s13 + $0x68] sm:$0xf]
  %v985 = vld [vmem:[%s13 + $0x6c] sm:$0xf]
  %v986 = vld [vmem:[%s13 + $0x70] sm:$0xf]
  %v987 = vld [vmem:[%s13 + $0x74] sm:$0xf]
  %v988 = vld [vmem:[%s13 + $0x78] sm:$0xf]
  %v989 = vld [vmem:[%s13 + $0x7c] sm:$0xf]
  %v990 = vld [vmem:[%s14] sm:$0xf]
  %v991 = vld [vmem:[%s14 + $0x4] sm:$0xf]
  %v992 = vld [vmem:[%s14 + $0x8] sm:$0xf]
  %v993 = vld [vmem:[%s14 + $0xc] sm:$0xf]
  %v998 = vunpack.c.l.b16 %v990
  %v999 = vunpack.c.l.b16 %v991
  %v1000 = vunpack.c.l.b16 %v992
  %v1001 = vunpack.c.l.b16 %v993
  %v1002 = vpack.c.b16 %v999, %v998
  %v1003 = vpack.c.b16 %v1001, %v1000
  %1006 = vmatprep.subr.bf16.mxu0 0
  %1007 = vmatpush1.bf16.msra.mxu0 %v1002
  %1008 = vmatprep.subr.bf16.mxu0 0
  %1009 = vmatpush1.bf16.msra.mxu0 %v1003
  %1010 = vmatprep.subr.bf16.mxu0 0
  %1011 = vmatpush1.bf16.msra.mxu0 0
  %1012 = vmatprep.subr.bf16.mxu0 0
  %1013 = vmatpush1.bf16.msra.mxu0 0
  %1014 = vmatprep.subr.bf16.mxu0 0
  %1015 = vmatpush1.bf16.msra.mxu0 0
  %1016 = vmatprep.subr.bf16.mxu0 0
  %1017 = vmatpush1.bf16.msra.mxu0 0
  %1018 = vmatprep.subr.bf16.mxu0 0
  %1019 = vmatpush1.bf16.msra.mxu0 0
  %1020 = vmatprep.subr.bf16.mxu0 0
  %1021 = vmatpush1.bf16.msra.mxu0 0
  %1022 = vmatprep.subr.bf16.mxu0 0
  %1023 = vmatpush1.bf16.msra.mxu0 0
  %1024 = vmatprep.subr.bf16.mxu0 0
  %1025 = vmatpush1.bf16.msra.mxu0 0
  %1026 = vmatprep.subr.bf16.mxu0 0
  %1027 = vmatpush1.bf16.msra.mxu0 0
  %1028 = vmatprep.subr.bf16.mxu0 0
  %1029 = vmatpush1.bf16.msra.mxu0 0
  %1030 = vmatprep.subr.bf16.mxu0 0
  %1031 = vmatpush1.bf16.msra.mxu0 0
  %1032 = vmatprep.subr.bf16.mxu0 0
  %1033 = vmatpush1.bf16.msra.mxu0 0
  %1034 = vmatprep.subr.bf16.mxu0 0
  %1035 = vmatpush1.bf16.msra.mxu0 0
  %1036 = vmatprep.subr.bf16.mxu0 0
  %1037 = vmatpush1.bf16.msra.mxu0 0
  %1038 = vmatprep.mubr.bf16.mxu0 0
  %1039 = vmatmul.mubr.bf16.gmra.mrb[0].mxu0 %v846
  %v1040 = vpop.f32.mrb[0].mxu0
  %v1041 = vadd.f32 0.0, %v1040
  %v1042 = vpop.f32.mrb[0].mxu0
  %v1043 = vpop.f32.mrb[0].mxu0
  %v1044 = vpop.f32.mrb[0].mxu0
  %1045 = vdwg.mxu0
  %v1078 = vunpack.c.l.b16 %v958
  %v1079 = vunpack.c.l.b16 %v959
  %v1080 = vunpack.c.l.b16 %v960
  %v1081 = vunpack.c.l.b16 %v961
  %v1082 = vunpack.c.l.b16 %v962
  %v1083 = vunpack.c.l.b16 %v963
  %v1084 = vunpack.c.l.b16 %v964
  %v1085 = vunpack.c.l.b16 %v965
  %v1086 = vunpack.c.l.b16 %v966
  %v1087 = vunpack.c.l.b16 %v967
  %v1088 = vunpack.c.l.b16 %v968
  %v1089 = vunpack.c.l.b16 %v969
  %v1090 = vunpack.c.l.b16 %v970
  %v1091 = vunpack.c.l.b16 %v971
  %v1092 = vunpack.c.l.b16 %v972
  %v1093 = vunpack.c.l.b16 %v973
  %v1094 = vunpack.c.l.b16 %v974
  %v1095 = vunpack.c.l.b16 %v975
  %v1096 = vunpack.c.l.b16 %v976
  %v1097 = vunpack.c.l.b16 %v977
  %v1098 = vunpack.c.l.b16 %v978
  %v1099 = vunpack.c.l.b16 %v979
  %v1100 = vunpack.c.l.b16 %v980
  %v1101 = vunpack.c.l.b16 %v981
  %v1102 = vunpack.c.l.b16 %v982
  %v1103 = vunpack.c.l.b16 %v983
  %v1104 = vunpack.c.l.b16 %v984
  %v1105 = vunpack.c.l.b16 %v985
  %v1106 = vunpack.c.l.b16 %v986
  %v1107 = vunpack.c.l.b16 %v987
  %v1108 = vunpack.c.l.b16 %v988
  %v1109 = vunpack.c.l.b16 %v989
  %v1110 = vpack.c.b16 %v1079, %v1078
  %v1111 = vpack.c.b16 %v1081, %v1080
  %v1112 = vpack.c.b16 %v1083, %v1082
  %v1113 = vpack.c.b16 %v1085, %v1084
  %v1114 = vpack.c.b16 %v1087, %v1086
  %v1115 = vpack.c.b16 %v1089, %v1088
  %v1116 = vpack.c.b16 %v1091, %v1090
  %v1117 = vpack.c.b16 %v1093, %v1092
  %v1118 = vpack.c.b16 %v1095, %v1094
  %v1119 = vpack.c.b16 %v1097, %v1096
  %v1120 = vpack.c.b16 %v1099, %v1098
  %v1121 = vpack.c.b16 %v1101, %v1100
  %v1122 = vpack.c.b16 %v1103, %v1102
  %v1123 = vpack.c.b16 %v1105, %v1104
  %v1124 = vpack.c.b16 %v1107, %v1106
  %v1125 = vpack.c.b16 %v1109, %v1108
  %1142 = vmatprep.subr.bf16.mxu0 0
  %1143 = vmatpush1.bf16.msra.mxu0 %v1110
  %1144 = vmatprep.subr.bf16.mxu0 0
  %1145 = vmatpush1.bf16.msra.mxu0 %v1111
  %1146 = vmatprep.subr.bf16.mxu0 0
  %1147 = vmatpush1.bf16.msra.mxu0 %v1112
  %1148 = vmatprep.subr.bf16.mxu0 0
  %1149 = vmatpush1.bf16.msra.mxu0 %v1113
  %1150 = vmatprep.subr.bf16.mxu0 0
  %1151 = vmatpush1.bf16.msra.mxu0 %v1114
  %1152 = vmatprep.subr.bf16.mxu0 0
  %1153 = vmatpush1.bf16.msra.mxu0 %v1115
  %1154 = vmatprep.subr.bf16.mxu0 0
  %1155 = vmatpush1.bf16.msra.mxu0 %v1116
  %1156 = vmatprep.subr.bf16.mxu0 0
  %1157 = vmatpush1.bf16.msra.mxu0 %v1117
  %1158 = vmatprep.subr.bf16.mxu0 0
  %1159 = vmatpush1.bf16.msra.mxu0 %v1118
  %1160 = vmatprep.subr.bf16.mxu0 0
  %1161 = vmatpush1.bf16.msra.mxu0 %v1119
  %1162 = vmatprep.subr.bf16.mxu0 0
  %1163 = vmatpush1.bf16.msra.mxu0 %v1120
  %1164 = vmatprep.subr.bf16.mxu0 0
  %1165 = vmatpush1.bf16.msra.mxu0 %v1121
  %1166 = vmatprep.subr.bf16.mxu0 0
  %1167 = vmatpush1.bf16.msra.mxu0 %v1122
  %1168 = vmatprep.subr.bf16.mxu0 0
  %1169 = vmatpush1.bf16.msra.mxu0 %v1123
  %1170 = vmatprep.subr.bf16.mxu0 0
  %1171 = vmatpush1.bf16.msra.mxu0 %v1124
  %1172 = vmatprep.subr.bf16.mxu0 0
  %1173 = vmatpush1.bf16.msra.mxu0 %v1125
  %1174 = vmatprep.mubr.bf16.mxu0 %v957
  %1175 = vmatmul.mubr.bf16.gmra.mrb[0].mxu0 %v956
  %v1176 = vpop.f32.mrb[0].mxu0
  %v1177 = vadd.f32 %v1041, %v1176
  %v1178 = vpop.f32.mrb[0].mxu0
  %v1179 = vpop.f32.mrb[0].mxu0
  %v1180 = vpop.f32.mrb[0].mxu0
  %1181 = vdwg.mxu0
  %v1182 = vld [vmem:[%s15] sm:$0xf]
  %v1183 = vld [vmem:[%s15 + $0x4] sm:$0xf]
  %v1184 = vld [vmem:[%s15 + $0x8] sm:$0xf]
  %v1185 = vld [vmem:[%s15 + $0xc] sm:$0xf]
  %v1190 = vunpack.c.l.b16 %v1182
  %v1191 = vunpack.c.l.b16 %v1183
  %v1192 = vunpack.c.l.b16 %v1184
  %v1193 = vunpack.c.l.b16 %v1185
  %v1194 = vpack.c.b16 %v1191, %v1190
  %v1195 = vpack.c.b16 %v1193, %v1192
  %1198 = vmatprep.subr.bf16.mxu0 0
  %1199 = vmatpush1.bf16.msra.mxu0 %v1194
  %1200 = vmatprep.subr.bf16.mxu0 0
  %1201 = vmatpush1.bf16.msra.mxu0 %v1195
  %1202 = vmatprep.subr.bf16.mxu0 0
  %1203 = vmatpush1.bf16.msra.mxu0 0
  %1204 = vmatprep.subr.bf16.mxu0 0
  %1205 = vmatpush1.bf16.msra.mxu0 0
  %1206 = vmatprep.subr.bf16.mxu0 0
  %1207 = vmatpush1.bf16.msra.mxu0 0
  %1208 = vmatprep.subr.bf16.mxu0 0
  %1209 = vmatpush1.bf16.msra.mxu0 0
  %1210 = vmatprep.subr.bf16.mxu0 0
  %1211 = vmatpush1.bf16.msra.mxu0 0
  %1212 = vmatprep.subr.bf16.mxu0 0
  %1213 = vmatpush1.bf16.msra.mxu0 0
  %1214 = vmatprep.subr.bf16.mxu0 0
  %1215 = vmatpush1.bf16.msra.mxu0 0
  %1216 = vmatprep.subr.bf16.mxu0 0
  %1217 = vmatpush1.bf16.msra.mxu0 0
  %1218 = vmatprep.subr.bf16.mxu0 0
  %1219 = vmatpush1.bf16.msra.mxu0 0
  %1220 = vmatprep.subr.bf16.mxu0 0
  %1221 = vmatpush1.bf16.msra.mxu0 0
  %1222 = vmatprep.subr.bf16.mxu0 0
  %1223 = vmatpush1.bf16.msra.mxu0 0
  %1224 = vmatprep.subr.bf16.mxu0 0
  %1225 = vmatpush1.bf16.msra.mxu0 0
  %1226 = vmatprep.subr.bf16.mxu0 0
  %1227 = vmatpush1.bf16.msra.mxu0 0
  %1228 = vmatprep.subr.bf16.mxu0 0
  %1229 = vmatpush1.bf16.msra.mxu0 0
  %1230 = vmatprep.mubr.bf16.mxu0 0
  %1231 = vmatmul.mubr.bf16.gmra.mrb[0].mxu0 %v278
  %v1232 = vpop.f32.mrb[0].mxu0
  %v1233 = vadd.f32 0.0, %v1232
  %v1234 = vpop.f32.mrb[0].mxu0
  %v1235 = vpop.f32.mrb[0].mxu0
  %v1236 = vpop.f32.mrb[0].mxu0
  %1237 = vdwg.mxu0
  %v1238 = vadd.f32 %v1177, %v1233
  %v1239 = vld [vmem:[%s16] sm:$0x1]
  %v1241 = vlaneseq
  %v1242 = vshrl.u32 %v1241, 7
  %v1243 = vsub.s32 0, %v1242
  %v1244 = vrot.slane %v1239, %v1243
  %v1246 = vadd.f32 %v1238, %v1244
  %v1247 = vmax.f32 %v1246, -20.0
  %v1248 = vmin.f32 %v1247, 2.0
  %v1249 = vmul.f32 %v1248, 1.442695
  %v1250 = vpow.pop %v1249
  %1252 = vrot.lane.b32.xlu0 %v59, 4
  %v1253 = vpop.permute.xlu0 %1252
  %v1255 = vmul.f32 %v1250, %v1253
  %1257 = vrot.lane.b32.xlu0 %v1255, 124
  %v1258 = vpop.permute.xlu0 %1257
  %v1260 = vadd.f32 %v1246, %v1258
  %v1261 = vtanh.pop %v1260
  %v1262 = vmul.f32 %v59, -0.5
  %v1263 = vmul.f32 %v1262, %v59
  %1265 = vrot.lane.b32.xlu0 %v1248, 124
  %v1266 = vpop.permute.xlu0 %1265
  %v1268 = vsub.f32 %v1263, %v1266
  %v1269 = vsub.f32 %v1268, 0.9189385
  %v1270 = vmul.f32 %v1261, %v1261
  %v1271 = vsub.f32 1.0, %v1270
  %v1272 = vadd.f32 %v1271, 1e-06
  %v1273 = vlog2.pop %v1272
  %v1274 = vmul.f32 %v1273, 0.6931472
  %v1275 = vsub.f32 %v1269, %v1274
  %vm1276 = vcmask 31744
  %v1277 = vsel %vm1276, %v1275, 0.0
  %1278 = vadd.xlane.f32.xlu0 %v1277
  %v1279 = vpop.xlane.xlu0 %1278
  %1281 = vrot.lane.b32.xlu0 %v1246, 4
  %v1282 = vpop.permute.xlu0 %1281
  %1284 = vrot.lane.b32.xlu0 %v1248, 4
  %v1285 = vpop.permute.xlu0 %1284
  %1288 = vrot.lane.b32.xlu0 %v1250, 8
  %v1289 = vpop.permute.xlu0 %1288
  %1292 = vrot.lane.b32.xlu0 %v1260, 16
  %v1293 = vpop.permute.xlu0 %1292
  %v1295 = vsel %vm1276, %v1261, %v1282
  %v1296 = vsel %vm68, %v1295, %v1285
  %vm1297 = vcmask 97280
  %v1298 = vsel %vm1297, %v1296, %v1289
  %v1299 = vsel %vm142, %v1298, %v1293
  %vm1300 = vcmask 162816
  %v1301 = vsel %vm1300, %v1299, %v1279
  %vm1302 = vcmask 171008
  %v1303 = vsel %vm1302, %v1301, 0.0
  %1304 = vst [vmem:[%s17] sm:$0xff] %v1303
  // Predicated region
  $region70: #{hyper_policy_forward.1} parent=0 // pred_check
    _
  $region71: #{hyper_policy_forward.1} parent=0 // pred_check_branch
    %1306 = sbr.rel (0) target = $region73
  $region72: #{hyper_policy_forward.1} parent=0 // pred_region
    _
  $region73: #{hyper_policy_forward.1} parent=0 // pred_fallthru
    _
  // Predicated region
  $region74: #{hyper_policy_forward.1} parent=0 // pred_check
    _
  $region75: #{hyper_policy_forward.1} parent=0 // pred_check_branch
    %1308 = sbr.rel (0) target = $region77
  $region76: #{hyper_policy_forward.1} parent=0 // pred_region
    _
  $region77: #{hyper_policy_forward.1} parent=0 // pred_fallthru
    _

</llo_original>
